<compile_context>
chip_gen: v5e
topology: v5e:2x2
jax: 0.10.0
libtpu: 0.0.40
codegen_flags: <defaults>
</compile_context>

<pallas_src>
import functools

import jax
import jax.numpy as jnp
from jax.experimental import pallas as pl
from jax.experimental.pallas import tpu as pltpu


# ----------------------------------------------------------------------------
# Fused Pallas kernels (one program per batch element)
# ----------------------------------------------------------------------------

def _rmsnorm(x, w):
    # T5LayerNorm: x * rsqrt(mean(x^2) + eps) * weight  (f32 math)
    var = jnp.mean(x * x, axis=-1, keepdims=True)
    return x * jax.lax.rsqrt(var + 1e-6) * w


def _attn_block_kernel(x_ref, ln_ref, wqkv_ref, wo_ref, bias_ref, mask_ref, o_ref,
                       *, n_heads, d_kv):
    # Fused: RMSNorm -> QKV matmul -> per-head softmax attention (+rel-pos bias,
    # +padding mask) -> output projection -> residual add.
    x = x_ref[0]                                            # (S, D) f32
    h = _rmsnorm(x, ln_ref[...]).astype(jnp.bfloat16)       # normalized, bf16 for MXU

    qkv = jnp.dot(h, wqkv_ref[...],
                  preferred_element_type=jnp.float32)       # (S, 3*H*Dh) f32
    inner = n_heads * d_kv
    mask = mask_ref[0]                                      # (1, S) additive (0 / -1e9)

    outs = []
    for hd in range(n_heads):                               # static unrolled head loop
        q = qkv[:, hd * d_kv:(hd + 1) * d_kv].astype(jnp.bfloat16)
        k = qkv[:, inner + hd * d_kv: inner + (hd + 1) * d_kv].astype(jnp.bfloat16)
        v = qkv[:, 2 * inner + hd * d_kv: 2 * inner + (hd + 1) * d_kv].astype(jnp.bfloat16)
        # T5 does NOT scale scores by sqrt(d_k)
        s = jax.lax.dot_general(q, k, (((1,), (1,)), ((), ())),
                                preferred_element_type=jnp.float32)
        s = s + bias_ref[hd] + mask                         # (S, S) f32
        s = s - jnp.max(s, axis=-1, keepdims=True)
        p = jnp.exp(s)
        p = p * pl.reciprocal(jnp.sum(p, axis=-1, keepdims=True), approx=True)
        outs.append(jnp.dot(p.astype(jnp.bfloat16), v,
                            preferred_element_type=jnp.float32))
    attn = jnp.concatenate(outs, axis=-1).astype(jnp.bfloat16)   # (S, H*Dh)

    o_ref[0] = x + jnp.dot(attn, wo_ref[...], preferred_element_type=jnp.float32)


def _ffn_block_kernel(x_ref, ln_ref, wi0_ref, wi1_ref, wo_ref, o_ref):
    # Fused: RMSNorm -> gelu_new(x@wi0) * (x@wi1) -> @wo -> residual add.
    x = x_ref[0]                                            # (S, D) f32
    h = _rmsnorm(x, ln_ref[...]).astype(jnp.bfloat16)
    g = jax.nn.gelu(jnp.dot(h, wi0_ref[...], preferred_element_type=jnp.float32),
                    approximate=True)                       # HF gelu_new
    u = jnp.dot(h, wi1_ref[...], preferred_element_type=jnp.float32)
    hh = (g * u).astype(jnp.bfloat16)
    o_ref[0] = x + jnp.dot(hh, wo_ref[...], preferred_element_type=jnp.float32)


def _head_kernel(x_ref, ln_ref, w_ref, b_ref, o_ref):
    # Fused: final RMSNorm -> lane-dense (padded to 128) classifier linear + bias.
    x = x_ref[0]                                            # (S, D) f32
    h = _rmsnorm(x, ln_ref[...]).astype(jnp.bfloat16)
    o_ref[0] = jnp.dot(h, w_ref[...], preferred_element_type=jnp.float32) + b_ref[...]


# ----------------------------------------------------------------------------
# Glue: T5 relative-position bucketing, parameter init
# ----------------------------------------------------------------------------

def _relative_position_bucket(relative_position, num_buckets=32, max_distance=128):
    # HF T5Attention._relative_position_bucket, bidirectional (encoder).
    num_buckets //= 2
    relative_buckets = (relative_position > 0).astype(jnp.int32) * num_buckets
    relative_position = jnp.abs(relative_position)
    max_exact = num_buckets // 2
    is_small = relative_position < max_exact
    rel_if_large = max_exact + (
        jnp.log(relative_position.astype(jnp.float32) / max_exact + 1e-20)
        / jnp.log(max_distance / max_exact)
        * (num_buckets - max_exact)
    ).astype(jnp.int32)
    rel_if_large = jnp.minimum(rel_if_large, num_buckets - 1)
    relative_buckets += jnp.where(is_small, relative_position, rel_if_large)
    return relative_buckets


HEAD_PAD = 128  # lane-dense padded classifier width


def init_params(key, cfg):
    keys = iter(jax.random.split(key, 64))

    def nrm(shape, scale=0.02, dtype=jnp.float32):
        return (scale * jax.random.normal(next(keys), shape, jnp.float32)).astype(dtype)

    D = cfg["d_model"]
    inner = cfg["n_heads"] * cfg["d_kv"]
    F = cfg["d_ff"]

    head_w = jnp.zeros((D, HEAD_PAD), jnp.float32)
    head_w = head_w.at[:, :cfg["num_classes"]].set(
        0.02 * jax.random.normal(next(keys), (D, cfg["num_classes"]), jnp.float32))

    params = {
        "embedding": nrm((cfg["vocab"], D), 1.0),
        "rel_bias": nrm((cfg["num_buckets"], cfg["n_heads"]), 0.1),
        "final_ln": jnp.ones((1, D), jnp.float32),
        "head_w": head_w.astype(jnp.bfloat16),
        "head_b": jnp.zeros((1, HEAD_PAD), jnp.float32),
        "layers": [],
    }
    for _ in range(cfg["n_layers"]):
        wq, wk, wv = nrm((D, inner)), nrm((D, inner)), nrm((D, inner))
        params["layers"].append({
            "ln1": jnp.ones((1, D), jnp.float32),
            "wqkv": jnp.concatenate([wq, wk, wv], axis=1).astype(jnp.bfloat16),
            "wo": nrm((inner, D), dtype=jnp.bfloat16),
            "ln2": jnp.ones((1, D), jnp.float32),
            "wi0": nrm((D, F), dtype=jnp.bfloat16),
            "wi1": nrm((D, F), dtype=jnp.bfloat16),
            "wo_ff": nrm((F, D), dtype=jnp.bfloat16),
        })
    return params


# ----------------------------------------------------------------------------
# Full forward pass (ByT5WithHead.forward)
# ----------------------------------------------------------------------------

def byt5_with_head_forward(token_ids, params, cfg):
    B, S = token_ids.shape
    D, H, Dh = cfg["d_model"], cfg["n_heads"], cfg["d_kv"]
    inner = H * Dh

    # --- ByT5Encoder ---
    hidden = params["embedding"][token_ids]                 # (B, S, D) f32, no sqrt(d) scaling

    # relative-position bias (layer 0, shared by all layers), kept un-broadcast: (H, S, S)
    pos = jnp.arange(S)
    rel = pos[None, :] - pos[:, None]                       # memory - query
    buckets = _relative_position_bucket(rel, cfg["num_buckets"], cfg["max_distance"])
    pos_bias = jnp.transpose(params["rel_bias"][buckets], (2, 0, 1))  # (H, S, S) f32

    # additive padding mask, (B, 1, S); finite -1e9 avoids -inf - -inf NaNs
    mask = jnp.where(token_ids == cfg["pad_token_id"], -1e9, 0.0).astype(jnp.float32)
    mask = mask[:, None, :]                                 # (B, 1, S)

    grid = (B,)
    parallel = pltpu.CompilerParams(dimension_semantics=("parallel",))
    act_spec = pl.BlockSpec((1, S, D), lambda b: (b, 0, 0))

    def vec_spec(n):
        return pl.BlockSpec((1, n), lambda b: (0, 0))

    def mat_spec(m, n):
        return pl.BlockSpec((m, n), lambda b: (0, 0))

    attn_kernel = functools.partial(_attn_block_kernel, n_heads=H, d_kv=Dh)

    for layer in params["layers"]:
        # -- fused self-attention block (RMSNorm + QKV + attn + out-proj + residual) --
        hidden = pl.pallas_call(
            attn_kernel,
            out_shape=jax.ShapeDtypeStruct((B, S, D), jnp.float32),
            grid=grid,
            in_specs=[act_spec,
                      vec_spec(D),
                      mat_spec(D, 3 * inner),
                      mat_spec(inner, D),
                      pl.BlockSpec((H, S, S), lambda b: (0, 0, 0)),
                      pl.BlockSpec((1, 1, S), lambda b: (b, 0, 0))],
            out_specs=act_spec,
            compiler_params=parallel,
        )(hidden, layer["ln1"], layer["wqkv"], layer["wo"], pos_bias, mask)

        # -- fused gated-GELU feed-forward block (RMSNorm + FFN + residual) --
        hidden = pl.pallas_call(
            _ffn_block_kernel,
            out_shape=jax.ShapeDtypeStruct((B, S, D), jnp.float32),
            grid=grid,
            in_specs=[act_spec,
                      vec_spec(D),
                      mat_spec(D, cfg["d_ff"]),
                      mat_spec(D, cfg["d_ff"]),
                      mat_spec(cfg["d_ff"], D)],
            out_specs=act_spec,
            compiler_params=parallel,
        )(hidden, layer["ln2"], layer["wi0"], layer["wi1"], layer["wo_ff"])

    # --- final RMSNorm + Head (lane-dense padded classifier) ---
    logits_pad = pl.pallas_call(
        _head_kernel,
        out_shape=jax.ShapeDtypeStruct((B, S, HEAD_PAD), jnp.float32),
        grid=grid,
        in_specs=[act_spec,
                  vec_spec(D),
                  mat_spec(D, HEAD_PAD),
                  vec_spec(HEAD_PAD)],
        out_specs=pl.BlockSpec((1, S, HEAD_PAD), lambda b: (b, 0, 0)),
        compiler_params=parallel,
    )(hidden, params["final_ln"], params["head_w"], params["head_b"])

    return logits_pad[..., :cfg["num_classes"]]


# ----------------------------------------------------------------------------
if __name__ == "__main__":
    cfg = dict(
        vocab=384,           # ByT5 byte vocabulary
        d_model=32,
        n_heads=4,
        d_kv=8,
        d_ff=64,
        n_layers=2,
        num_buckets=32,
        max_distance=128,
        num_classes=3,       # whitespace-correction classes per token
        pad_token_id=0,
    )
    key = jax.random.PRNGKey(0)
    pkey, dkey = jax.random.split(key)
    params = init_params(pkey, cfg)

    B, S = 2, 8
    token_ids = jax.random.randint(dkey, (B, S), 3, cfg["vocab"], dtype=jnp.int32)
    token_ids = token_ids.at[1, 6:].set(cfg["pad_token_id"])   # some padding

    fwd = jax.jit(functools.partial(byt5_with_head_forward, cfg=cfg))
    logits = fwd(token_ids, params)
    jax.block_until_ready(logits)
    assert logits.shape == (B, S, cfg["num_classes"])
    assert bool(jnp.all(jnp.isfinite(logits)))
    print("KERNEL_OK")
</pallas_src>

<mosaic_0001>
module attributes {stable_mosaic.version = 11 : i64} {
  func.func @_attn_block_kernel(%arg0: i32, %arg1: memref<1x8x32xf32, #tpu.memory_space<vmem>>, %arg2: memref<1x32xf32, #tpu.memory_space<vmem>>, %arg3: memref<32x96xbf16, #tpu.memory_space<vmem>>, %arg4: memref<32x32xbf16, #tpu.memory_space<vmem>>, %arg5: memref<4x8x8xf32, #tpu.memory_space<vmem>>, %arg6: memref<1x1x8xf32, #tpu.memory_space<vmem>>, %arg7: memref<1x8x32xf32, #tpu.memory_space<vmem>>) attributes {dimension_semantics = [#tpu.dimension_semantics<parallel>], iteration_bounds = array<i64: 2>, scalar_prefetch = 0 : i64, scratch_operands = 0 : i64, tpu.core_type = #tpu.core_type<tc>, window_params = [{transform_indices = @transform_0, window_bounds = array<i64: 1, 8, 32>}, {pipeline_mode = #tpu.pipeline_mode<synchronous>, transform_indices = @transform_1, window_bounds = array<i64: 1, 32>}, {pipeline_mode = #tpu.pipeline_mode<synchronous>, transform_indices = @transform_2, window_bounds = array<i64: 32, 96>}, {pipeline_mode = #tpu.pipeline_mode<synchronous>, transform_indices = @transform_3, window_bounds = array<i64: 32, 32>}, {pipeline_mode = #tpu.pipeline_mode<synchronous>, transform_indices = @transform_4, window_bounds = array<i64: 4, 8, 8>}, {transform_indices = @transform_5, window_bounds = array<i64: 1, 1, 8>}, {transform_indices = @transform_6, window_bounds = array<i64: 1, 8, 32>}]} {
    %c0 = arith.constant 0 : index
    %c0_0 = arith.constant 0 : index
    %c0_1 = arith.constant 0 : index
    %0 = vector.load %arg1[%c0, %c0_0, %c0_1] : memref<1x8x32xf32, #tpu.memory_space<vmem>>, vector<1x8x32xf32>
    %1 = vector.shape_cast %0 : vector<1x8x32xf32> to vector<8x32xf32>
    %c0_2 = arith.constant 0 : index
    %c0_3 = arith.constant 0 : index
    %2 = vector.load %arg2[%c0_2, %c0_3] : memref<1x32xf32, #tpu.memory_space<vmem>>, vector<1x32xf32>
    %3 = arith.mulf %1, %1 : vector<8x32xf32>
    %cst = arith.constant dense<0.000000e+00> : vector<8xf32>
    %4 = vector.multi_reduction <add>, %3, %cst [1] : vector<8x32xf32> to vector<8xf32>
    %5 = vector.shape_cast %4 : vector<8xf32> to vector<8x1xf32>
    %cst_4 = arith.constant 3.200000e+01 : f32
    %6 = vector.broadcast %cst_4 : f32 to vector<8x1xf32>
    %7 = arith.divf %5, %6 : vector<8x1xf32>
    %cst_5 = arith.constant 9.99999997E-7 : f32
    %8 = vector.broadcast %cst_5 : f32 to vector<8x1xf32>
    %9 = arith.addf %7, %8 : vector<8x1xf32>
    %10 = math.rsqrt %9 : vector<8x1xf32>
    %11 = vector.broadcast %10 : vector<8x1xf32> to vector<8x32xf32>
    %12 = arith.mulf %1, %11 : vector<8x32xf32>
    %13 = vector.broadcast %2 : vector<1x32xf32> to vector<8x32xf32>
    %14 = arith.mulf %12, %13 : vector<8x32xf32>
    %15 = arith.truncf %14 : vector<8x32xf32> to vector<8x32xbf16>
    %c0_6 = arith.constant 0 : index
    %c0_7 = arith.constant 0 : index
    %16 = vector.load %arg3[%c0_6, %c0_7] : memref<32x96xbf16, #tpu.memory_space<vmem>>, vector<32x96xbf16>
    %cst_8 = arith.constant dense<0.000000e+00> : vector<8x96xf32>
    %17 = tpu.matmul %15, %16, %cst_8 {dimension_numbers = #tpu.dot_dimension_numbers<[1], [0], [0], [1], [0, 0, 1, 1], [], []>} : vector<8x32xbf16>, vector<32x96xbf16>, vector<8x96xf32> -> vector<8x96xf32>
    %c0_9 = arith.constant 0 : index
    %c0_10 = arith.constant 0 : index
    %c0_11 = arith.constant 0 : index
    %18 = vector.load %arg6[%c0_9, %c0_10, %c0_11] : memref<1x1x8xf32, #tpu.memory_space<vmem>>, vector<1x1x8xf32>
    %19 = vector.shape_cast %18 : vector<1x1x8xf32> to vector<1x8xf32>
    %20 = vector.extract_strided_slice %17 {offsets = [0, 0], sizes = [8, 8], strides = [1, 1]} : vector<8x96xf32> to vector<8x8xf32>
    %21 = arith.truncf %20 : vector<8x8xf32> to vector<8x8xbf16>
    %22 = vector.extract_strided_slice %17 {offsets = [0, 32], sizes = [8, 8], strides = [1, 1]} : vector<8x96xf32> to vector<8x8xf32>
    %23 = arith.truncf %22 : vector<8x8xf32> to vector<8x8xbf16>
    %24 = vector.extract_strided_slice %17 {offsets = [0, 64], sizes = [8, 8], strides = [1, 1]} : vector<8x96xf32> to vector<8x8xf32>
    %25 = arith.truncf %24 : vector<8x8xf32> to vector<8x8xbf16>
    %cst_12 = arith.constant dense<0.000000e+00> : vector<8x8xf32>
    %26 = tpu.matmul %21, %23, %cst_12 {dimension_numbers = #tpu.dot_dimension_numbers<[1], [1], [0], [0], [0, 0, 1, 0], [], []>} : vector<8x8xbf16>, vector<8x8xbf16>, vector<8x8xf32> -> vector<8x8xf32>
    %c0_13 = arith.constant 0 : index
    %c0_14 = arith.constant 0 : index
    %c0_15 = arith.constant 0 : index
    %27 = vector.load %arg5[%c0_13, %c0_14, %c0_15] : memref<4x8x8xf32, #tpu.memory_space<vmem>>, vector<1x8x8xf32>
    %28 = vector.shape_cast %27 : vector<1x8x8xf32> to vector<8x8xf32>
    %29 = arith.addf %26, %28 : vector<8x8xf32>
    %30 = vector.broadcast %19 : vector<1x8xf32> to vector<8x8xf32>
    %31 = arith.addf %29, %30 : vector<8x8xf32>
    %cst_16 = arith.constant dense<0xFF800000> : vector<8xf32>
    %32 = vector.multi_reduction <maximumf>, %31, %cst_16 [1] : vector<8x8xf32> to vector<8xf32>
    %33 = vector.shape_cast %32 : vector<8xf32> to vector<8x1xf32>
    %34 = vector.broadcast %33 : vector<8x1xf32> to vector<8x8xf32>
    %35 = arith.subf %31, %34 : vector<8x8xf32>
    %36 = math.exp %35 : vector<8x8xf32>
    %cst_17 = arith.constant dense<0.000000e+00> : vector<8xf32>
    %37 = vector.multi_reduction <add>, %36, %cst_17 [1] : vector<8x8xf32> to vector<8xf32>
    %38 = vector.shape_cast %37 : vector<8xf32> to vector<8x1xf32>
    %39 = tpu.reciprocal %38 {approx = true} : vector<8x1xf32> -> vector<8x1xf32>
    %40 = vector.broadcast %39 : vector<8x1xf32> to vector<8x8xf32>
    %41 = arith.mulf %36, %40 : vector<8x8xf32>
    %42 = arith.truncf %41 : vector<8x8xf32> to vector<8x8xbf16>
    %cst_18 = arith.constant dense<0.000000e+00> : vector<8x8xf32>
    %43 = tpu.matmul %42, %25, %cst_18 {dimension_numbers = #tpu.dot_dimension_numbers<[1], [0], [0], [1], [0, 0, 1, 1], [], []>} : vector<8x8xbf16>, vector<8x8xbf16>, vector<8x8xf32> -> vector<8x8xf32>
    %44 = vector.extract_strided_slice %17 {offsets = [0, 8], sizes = [8, 8], strides = [1, 1]} : vector<8x96xf32> to vector<8x8xf32>
    %45 = arith.truncf %44 : vector<8x8xf32> to vector<8x8xbf16>
    %46 = vector.extract_strided_slice %17 {offsets = [0, 40], sizes = [8, 8], strides = [1, 1]} : vector<8x96xf32> to vector<8x8xf32>
    %47 = arith.truncf %46 : vector<8x8xf32> to vector<8x8xbf16>
    %48 = vector.extract_strided_slice %17 {offsets = [0, 72], sizes = [8, 8], strides = [1, 1]} : vector<8x96xf32> to vector<8x8xf32>
    %49 = arith.truncf %48 : vector<8x8xf32> to vector<8x8xbf16>
    %cst_19 = arith.constant dense<0.000000e+00> : vector<8x8xf32>
    %50 = tpu.matmul %45, %47, %cst_19 {dimension_numbers = #tpu.dot_dimension_numbers<[1], [1], [0], [0], [0, 0, 1, 0], [], []>} : vector<8x8xbf16>, vector<8x8xbf16>, vector<8x8xf32> -> vector<8x8xf32>
    %c1 = arith.constant 1 : index
    %c0_20 = arith.constant 0 : index
    %c0_21 = arith.constant 0 : index
    %51 = vector.load %arg5[%c1, %c0_20, %c0_21] : memref<4x8x8xf32, #tpu.memory_space<vmem>>, vector<1x8x8xf32>
    %52 = vector.shape_cast %51 : vector<1x8x8xf32> to vector<8x8xf32>
    %53 = arith.addf %50, %52 : vector<8x8xf32>
    %54 = vector.broadcast %19 : vector<1x8xf32> to vector<8x8xf32>
    %55 = arith.addf %53, %54 : vector<8x8xf32>
    %cst_22 = arith.constant dense<0xFF800000> : vector<8xf32>
    %56 = vector.multi_reduction <maximumf>, %55, %cst_22 [1] : vector<8x8xf32> to vector<8xf32>
    %57 = vector.shape_cast %56 : vector<8xf32> to vector<8x1xf32>
    %58 = vector.broadcast %57 : vector<8x1xf32> to vector<8x8xf32>
    %59 = arith.subf %55, %58 : vector<8x8xf32>
    %60 = math.exp %59 : vector<8x8xf32>
    %cst_23 = arith.constant dense<0.000000e+00> : vector<8xf32>
    %61 = vector.multi_reduction <add>, %60, %cst_23 [1] : vector<8x8xf32> to vector<8xf32>
    %62 = vector.shape_cast %61 : vector<8xf32> to vector<8x1xf32>
    %63 = tpu.reciprocal %62 {approx = true} : vector<8x1xf32> -> vector<8x1xf32>
    %64 = vector.broadcast %63 : vector<8x1xf32> to vector<8x8xf32>
    %65 = arith.mulf %60, %64 : vector<8x8xf32>
    %66 = arith.truncf %65 : vector<8x8xf32> to vector<8x8xbf16>
    %cst_24 = arith.constant dense<0.000000e+00> : vector<8x8xf32>
    %67 = tpu.matmul %66, %49, %cst_24 {dimension_numbers = #tpu.dot_dimension_numbers<[1], [0], [0], [1], [0, 0, 1, 1], [], []>} : vector<8x8xbf16>, vector<8x8xbf16>, vector<8x8xf32> -> vector<8x8xf32>
    %68 = vector.extract_strided_slice %17 {offsets = [0, 16], sizes = [8, 8], strides = [1, 1]} : vector<8x96xf32> to vector<8x8xf32>
    %69 = arith.truncf %68 : vector<8x8xf32> to vector<8x8xbf16>
    %70 = vector.extract_strided_slice %17 {offsets = [0, 48], sizes = [8, 8], strides = [1, 1]} : vector<8x96xf32> to vector<8x8xf32>
    %71 = arith.truncf %70 : vector<8x8xf32> to vector<8x8xbf16>
    %72 = vector.extract_strided_slice %17 {offsets = [0, 80], sizes = [8, 8], strides = [1, 1]} : vector<8x96xf32> to vector<8x8xf32>
    %73 = arith.truncf %72 : vector<8x8xf32> to vector<8x8xbf16>
    %cst_25 = arith.constant dense<0.000000e+00> : vector<8x8xf32>
    %74 = tpu.matmul %69, %71, %cst_25 {dimension_numbers = #tpu.dot_dimension_numbers<[1], [1], [0], [0], [0, 0, 1, 0], [], []>} : vector<8x8xbf16>, vector<8x8xbf16>, vector<8x8xf32> -> vector<8x8xf32>
    %c2 = arith.constant 2 : index
    %c0_26 = arith.constant 0 : index
    %c0_27 = arith.constant 0 : index
    %75 = vector.load %arg5[%c2, %c0_26, %c0_27] : memref<4x8x8xf32, #tpu.memory_space<vmem>>, vector<1x8x8xf32>
    %76 = vector.shape_cast %75 : vector<1x8x8xf32> to vector<8x8xf32>
    %77 = arith.addf %74, %76 : vector<8x8xf32>
    %78 = vector.broadcast %19 : vector<1x8xf32> to vector<8x8xf32>
    %79 = arith.addf %77, %78 : vector<8x8xf32>
    %cst_28 = arith.constant dense<0xFF800000> : vector<8xf32>
    %80 = vector.multi_reduction <maximumf>, %79, %cst_28 [1] : vector<8x8xf32> to vector<8xf32>
    %81 = vector.shape_cast %80 : vector<8xf32> to vector<8x1xf32>
    %82 = vector.broadcast %81 : vector<8x1xf32> to vector<8x8xf32>
    %83 = arith.subf %79, %82 : vector<8x8xf32>
    %84 = math.exp %83 : vector<8x8xf32>
    %cst_29 = arith.constant dense<0.000000e+00> : vector<8xf32>
    %85 = vector.multi_reduction <add>, %84, %cst_29 [1] : vector<8x8xf32> to vector<8xf32>
    %86 = vector.shape_cast %85 : vector<8xf32> to vector<8x1xf32>
    %87 = tpu.reciprocal %86 {approx = true} : vector<8x1xf32> -> vector<8x1xf32>
    %88 = vector.broadcast %87 : vector<8x1xf32> to vector<8x8xf32>
    %89 = arith.mulf %84, %88 : vector<8x8xf32>
    %90 = arith.truncf %89 : vector<8x8xf32> to vector<8x8xbf16>
    %cst_30 = arith.constant dense<0.000000e+00> : vector<8x8xf32>
    %91 = tpu.matmul %90, %73, %cst_30 {dimension_numbers = #tpu.dot_dimension_numbers<[1], [0], [0], [1], [0, 0, 1, 1], [], []>} : vector<8x8xbf16>, vector<8x8xbf16>, vector<8x8xf32> -> vector<8x8xf32>
    %92 = vector.extract_strided_slice %17 {offsets = [0, 24], sizes = [8, 8], strides = [1, 1]} : vector<8x96xf32> to vector<8x8xf32>
    %93 = arith.truncf %92 : vector<8x8xf32> to vector<8x8xbf16>
    %94 = vector.extract_strided_slice %17 {offsets = [0, 56], sizes = [8, 8], strides = [1, 1]} : vector<8x96xf32> to vector<8x8xf32>
    %95 = arith.truncf %94 : vector<8x8xf32> to vector<8x8xbf16>
    %96 = vector.extract_strided_slice %17 {offsets = [0, 88], sizes = [8, 8], strides = [1, 1]} : vector<8x96xf32> to vector<8x8xf32>
    %97 = arith.truncf %96 : vector<8x8xf32> to vector<8x8xbf16>
    %cst_31 = arith.constant dense<0.000000e+00> : vector<8x8xf32>
    %98 = tpu.matmul %93, %95, %cst_31 {dimension_numbers = #tpu.dot_dimension_numbers<[1], [1], [0], [0], [0, 0, 1, 0], [], []>} : vector<8x8xbf16>, vector<8x8xbf16>, vector<8x8xf32> -> vector<8x8xf32>
    %c3 = arith.constant 3 : index
    %c0_32 = arith.constant 0 : index
    %c0_33 = arith.constant 0 : index
    %99 = vector.load %arg5[%c3, %c0_32, %c0_33] : memref<4x8x8xf32, #tpu.memory_space<vmem>>, vector<1x8x8xf32>
    %100 = vector.shape_cast %99 : vector<1x8x8xf32> to vector<8x8xf32>
    %101 = arith.addf %98, %100 : vector<8x8xf32>
    %102 = vector.broadcast %19 : vector<1x8xf32> to vector<8x8xf32>
    %103 = arith.addf %101, %102 : vector<8x8xf32>
    %cst_34 = arith.constant dense<0xFF800000> : vector<8xf32>
    %104 = vector.multi_reduction <maximumf>, %103, %cst_34 [1] : vector<8x8xf32> to vector<8xf32>
    %105 = vector.shape_cast %104 : vector<8xf32> to vector<8x1xf32>
    %106 = vector.broadcast %105 : vector<8x1xf32> to vector<8x8xf32>
    %107 = arith.subf %103, %106 : vector<8x8xf32>
    %108 = math.exp %107 : vector<8x8xf32>
    %cst_35 = arith.constant dense<0.000000e+00> : vector<8xf32>
    %109 = vector.multi_reduction <add>, %108, %cst_35 [1] : vector<8x8xf32> to vector<8xf32>
    %110 = vector.shape_cast %109 : vector<8xf32> to vector<8x1xf32>
    %111 = tpu.reciprocal %110 {approx = true} : vector<8x1xf32> -> vector<8x1xf32>
    %112 = vector.broadcast %111 : vector<8x1xf32> to vector<8x8xf32>
    %113 = arith.mulf %108, %112 : vector<8x8xf32>
    %114 = arith.truncf %113 : vector<8x8xf32> to vector<8x8xbf16>
    %cst_36 = arith.constant dense<0.000000e+00> : vector<8x8xf32>
    %115 = tpu.matmul %114, %97, %cst_36 {dimension_numbers = #tpu.dot_dimension_numbers<[1], [0], [0], [1], [0, 0, 1, 1], [], []>} : vector<8x8xbf16>, vector<8x8xbf16>, vector<8x8xf32> -> vector<8x8xf32>
    %116 = tpu.concatenate %43, %67, %91, %115 in 1 : vector<8x8xf32>, vector<8x8xf32>, vector<8x8xf32>, vector<8x8xf32> -> vector<8x32xf32>
    %117 = arith.truncf %116 : vector<8x32xf32> to vector<8x32xbf16>
    %c0_37 = arith.constant 0 : index
    %c0_38 = arith.constant 0 : index
    %118 = vector.load %arg4[%c0_37, %c0_38] : memref<32x32xbf16, #tpu.memory_space<vmem>>, vector<32x32xbf16>
    %cst_39 = arith.constant dense<0.000000e+00> : vector<8x32xf32>
    %119 = tpu.matmul %117, %118, %cst_39 {dimension_numbers = #tpu.dot_dimension_numbers<[1], [0], [0], [1], [0, 0, 1, 1], [], []>} : vector<8x32xbf16>, vector<32x32xbf16>, vector<8x32xf32> -> vector<8x32xf32>
    %120 = arith.addf %1, %119 : vector<8x32xf32>
    %c0_40 = arith.constant 0 : index
    %c0_41 = arith.constant 0 : index
    %c0_42 = arith.constant 0 : index
    %121 = vector.load %arg7[%c0_40, %c0_41, %c0_42] : memref<1x8x32xf32, #tpu.memory_space<vmem>>, vector<1x8x32xf32>
    %122 = vector.shape_cast %121 : vector<1x8x32xf32> to vector<8x32xf32>
    %123 = vector.shape_cast %120 : vector<8x32xf32> to vector<1x8x32xf32>
    tpu.vector_store %arg7[%c0_40, %c0_41, %c0_42], %123 {strides = array<i32>} : memref<1x8x32xf32, #tpu.memory_space<vmem>>, vector<1x8x32xf32>,
    return
  }
  func.func @transform_0(%arg0: i32) -> (i32, i32, i32) {
    %c0_i32 = arith.constant 0 : i32
    %c0_i32_0 = arith.constant 0 : i32
    %c0_i32_1 = arith.constant 0 : i32
    return %arg0, %c0_i32, %c0_i32_0 : i32, i32, i32
  }
  func.func @transform_1(%arg0: i32) -> (i32, i32) {
    %c0_i32 = arith.constant 0 : i32
    %c0_i32_0 = arith.constant 0 : i32
    %c0_i32_1 = arith.constant 0 : i32
    return %c0_i32, %c0_i32_0 : i32, i32
  }
  func.func @transform_2(%arg0: i32) -> (i32, i32) {
    %c0_i32 = arith.constant 0 : i32
    %c0_i32_0 = arith.constant 0 : i32
    %c0_i32_1 = arith.constant 0 : i32
    return %c0_i32, %c0_i32_0 : i32, i32
  }
  func.func @transform_3(%arg0: i32) -> (i32, i32) {
    %c0_i32 = arith.constant 0 : i32
    %c0_i32_0 = arith.constant 0 : i32
    %c0_i32_1 = arith.constant 0 : i32
    return %c0_i32, %c0_i32_0 : i32, i32
  }
  func.func @transform_4(%arg0: i32) -> (i32, i32, i32) {
    %c0_i32 = arith.constant 0 : i32
    %c0_i32_0 = arith.constant 0 : i32
    %c0_i32_1 = arith.constant 0 : i32
    %c0_i32_2 = arith.constant 0 : i32
    return %c0_i32, %c0_i32_0, %c0_i32_1 : i32, i32, i32
  }
  func.func @transform_5(%arg0: i32) -> (i32, i32, i32) {
    %c0_i32 = arith.constant 0 : i32
    %c0_i32_0 = arith.constant 0 : i32
    %c0_i32_1 = arith.constant 0 : i32
    return %arg0, %c0_i32, %c0_i32_0 : i32, i32, i32
  }
  func.func @transform_6(%arg0: i32) -> (i32, i32, i32) {
    %c0_i32 = arith.constant 0 : i32
    %c0_i32_0 = arith.constant 0 : i32
    %c0_i32_1 = arith.constant 0 : i32
    return %arg0, %c0_i32, %c0_i32_0 : i32, i32, i32
  }
}

module attributes {stable_mosaic.version = 11 : i64} {
  func.func @_ffn_block_kernel(%arg0: i32, %arg1: memref<1x8x32xf32, #tpu.memory_space<vmem>>, %arg2: memref<1x32xf32, #tpu.memory_space<vmem>>, %arg3: memref<32x64xbf16, #tpu.memory_space<vmem>>, %arg4: memref<32x64xbf16, #tpu.memory_space<vmem>>, %arg5: memref<64x32xbf16, #tpu.memory_space<vmem>>, %arg6: memref<1x8x32xf32, #tpu.memory_space<vmem>>) attributes {dimension_semantics = [#tpu.dimension_semantics<parallel>], iteration_bounds = array<i64: 2>, scalar_prefetch = 0 : i64, scratch_operands = 0 : i64, tpu.core_type = #tpu.core_type<tc>, window_params = [{transform_indices = @transform_0, window_bounds = array<i64: 1, 8, 32>}, {pipeline_mode = #tpu.pipeline_mode<synchronous>, transform_indices = @transform_1, window_bounds = array<i64: 1, 32>}, {pipeline_mode = #tpu.pipeline_mode<synchronous>, transform_indices = @transform_2, window_bounds = array<i64: 32, 64>}, {pipeline_mode = #tpu.pipeline_mode<synchronous>, transform_indices = @transform_3, window_bounds = array<i64: 32, 64>}, {pipeline_mode = #tpu.pipeline_mode<synchronous>, transform_indices = @transform_4, window_bounds = array<i64: 64, 32>}, {transform_indices = @transform_5, window_bounds = array<i64: 1, 8, 32>}]} {
    %c0 = arith.constant 0 : index
    %c0_0 = arith.constant 0 : index
    %c0_1 = arith.constant 0 : index
    %0 = vector.load %arg1[%c0, %c0_0, %c0_1] : memref<1x8x32xf32, #tpu.memory_space<vmem>>, vector<1x8x32xf32>
    %1 = vector.shape_cast %0 : vector<1x8x32xf32> to vector<8x32xf32>
    %c0_2 = arith.constant 0 : index
    %c0_3 = arith.constant 0 : index
    %2 = vector.load %arg2[%c0_2, %c0_3] : memref<1x32xf32, #tpu.memory_space<vmem>>, vector<1x32xf32>
    %3 = arith.mulf %1, %1 : vector<8x32xf32>
    %cst = arith.constant dense<0.000000e+00> : vector<8xf32>
    %4 = vector.multi_reduction <add>, %3, %cst [1] : vector<8x32xf32> to vector<8xf32>
    %5 = vector.shape_cast %4 : vector<8xf32> to vector<8x1xf32>
    %cst_4 = arith.constant 3.200000e+01 : f32
    %6 = vector.broadcast %cst_4 : f32 to vector<8x1xf32>
    %7 = arith.divf %5, %6 : vector<8x1xf32>
    %cst_5 = arith.constant 9.99999997E-7 : f32
    %8 = vector.broadcast %cst_5 : f32 to vector<8x1xf32>
    %9 = arith.addf %7, %8 : vector<8x1xf32>
    %10 = math.rsqrt %9 : vector<8x1xf32>
    %11 = vector.broadcast %10 : vector<8x1xf32> to vector<8x32xf32>
    %12 = arith.mulf %1, %11 : vector<8x32xf32>
    %13 = vector.broadcast %2 : vector<1x32xf32> to vector<8x32xf32>
    %14 = arith.mulf %12, %13 : vector<8x32xf32>
    %15 = arith.truncf %14 : vector<8x32xf32> to vector<8x32xbf16>
    %c0_6 = arith.constant 0 : index
    %c0_7 = arith.constant 0 : index
    %16 = vector.load %arg3[%c0_6, %c0_7] : memref<32x64xbf16, #tpu.memory_space<vmem>>, vector<32x64xbf16>
    %cst_8 = arith.constant dense<0.000000e+00> : vector<8x64xf32>
    %17 = tpu.matmul %15, %16, %cst_8 {dimension_numbers = #tpu.dot_dimension_numbers<[1], [0], [0], [1], [0, 0, 1, 1], [], []>} : vector<8x32xbf16>, vector<32x64xbf16>, vector<8x64xf32> -> vector<8x64xf32>
    %18 = arith.mulf %17, %17 : vector<8x64xf32>
    %19 = arith.mulf %17, %18 : vector<8x64xf32>
    %cst_9 = arith.constant 4.471500e-02 : f32
    %20 = vector.broadcast %cst_9 : f32 to vector<8x64xf32>
    %21 = arith.mulf %20, %19 : vector<8x64xf32>
    %22 = arith.addf %17, %21 : vector<8x64xf32>
    %cst_10 = arith.constant 0.797884583 : f32
    %23 = vector.broadcast %cst_10 : f32 to vector<8x64xf32>
    %24 = arith.mulf %23, %22 : vector<8x64xf32>
    %25 = math.tanh %24 : vector<8x64xf32>
    %cst_11 = arith.constant 1.000000e+00 : f32
    %26 = vector.broadcast %cst_11 : f32 to vector<8x64xf32>
    %27 = arith.addf %26, %25 : vector<8x64xf32>
    %cst_12 = arith.constant 5.000000e-01 : f32
    %28 = vector.broadcast %cst_12 : f32 to vector<8x64xf32>
    %29 = arith.mulf %28, %27 : vector<8x64xf32>
    %30 = arith.mulf %17, %29 : vector<8x64xf32>
    %c0_13 = arith.constant 0 : index
    %c0_14 = arith.constant 0 : index
    %31 = vector.load %arg4[%c0_13, %c0_14] : memref<32x64xbf16, #tpu.memory_space<vmem>>, vector<32x64xbf16>
    %cst_15 = arith.constant dense<0.000000e+00> : vector<8x64xf32>
    %32 = tpu.matmul %15, %31, %cst_15 {dimension_numbers = #tpu.dot_dimension_numbers<[1], [0], [0], [1], [0, 0, 1, 1], [], []>} : vector<8x32xbf16>, vector<32x64xbf16>, vector<8x64xf32> -> vector<8x64xf32>
    %33 = arith.mulf %30, %32 : vector<8x64xf32>
    %34 = arith.truncf %33 : vector<8x64xf32> to vector<8x64xbf16>
    %c0_16 = arith.constant 0 : index
    %c0_17 = arith.constant 0 : index
    %35 = vector.load %arg5[%c0_16, %c0_17] : memref<64x32xbf16, #tpu.memory_space<vmem>>, vector<64x32xbf16>
    %cst_18 = arith.constant dense<0.000000e+00> : vector<8x32xf32>
    %36 = tpu.matmul %34, %35, %cst_18 {dimension_numbers = #tpu.dot_dimension_numbers<[1], [0], [0], [1], [0, 0, 1, 1], [], []>} : vector<8x64xbf16>, vector<64x32xbf16>, vector<8x32xf32> -> vector<8x32xf32>
    %37 = arith.addf %1, %36 : vector<8x32xf32>
    %c0_19 = arith.constant 0 : index
    %c0_20 = arith.constant 0 : index
    %c0_21 = arith.constant 0 : index
    %38 = vector.load %arg6[%c0_19, %c0_20, %c0_21] : memref<1x8x32xf32, #tpu.memory_space<vmem>>, vector<1x8x32xf32>
    %39 = vector.shape_cast %38 : vector<1x8x32xf32> to vector<8x32xf32>
    %40 = vector.shape_cast %37 : vector<8x32xf32> to vector<1x8x32xf32>
    tpu.vector_store %arg6[%c0_19, %c0_20, %c0_21], %40 {strides = array<i32>} : memref<1x8x32xf32, #tpu.memory_space<vmem>>, vector<1x8x32xf32>,
    return
  }
  func.func @transform_0(%arg0: i32) -> (i32, i32, i32) {
    %c0_i32 = arith.constant 0 : i32
    %c0_i32_0 = arith.constant 0 : i32
    %c0_i32_1 = arith.constant 0 : i32
    return %arg0, %c0_i32, %c0_i32_0 : i32, i32, i32
  }
  func.func @transform_1(%arg0: i32) -> (i32, i32) {
    %c0_i32 = arith.constant 0 : i32
    %c0_i32_0 = arith.constant 0 : i32
    %c0_i32_1 = arith.constant 0 : i32
    return %c0_i32, %c0_i32_0 : i32, i32
  }
  func.func @transform_2(%arg0: i32) -> (i32, i32) {
    %c0_i32 = arith.constant 0 : i32
    %c0_i32_0 = arith.constant 0 : i32
    %c0_i32_1 = arith.constant 0 : i32
    return %c0_i32, %c0_i32_0 : i32, i32
  }
  func.func @transform_3(%arg0: i32) -> (i32, i32) {
    %c0_i32 = arith.constant 0 : i32
    %c0_i32_0 = arith.constant 0 : i32
    %c0_i32_1 = arith.constant 0 : i32
    return %c0_i32, %c0_i32_0 : i32, i32
  }
  func.func @transform_4(%arg0: i32) -> (i32, i32) {
    %c0_i32 = arith.constant 0 : i32
    %c0_i32_0 = arith.constant 0 : i32
    %c0_i32_1 = arith.constant 0 : i32
    return %c0_i32, %c0_i32_0 : i32, i32
  }
  func.func @transform_5(%arg0: i32) -> (i32, i32, i32) {
    %c0_i32 = arith.constant 0 : i32
    %c0_i32_0 = arith.constant 0 : i32
    %c0_i32_1 = arith.constant 0 : i32
    return %arg0, %c0_i32, %c0_i32_0 : i32, i32, i32
  }
}

module attributes {stable_mosaic.version = 11 : i64} {
  func.func @_head_kernel(%arg0: i32, %arg1: memref<1x8x32xf32, #tpu.memory_space<vmem>>, %arg2: memref<1x32xf32, #tpu.memory_space<vmem>>, %arg3: memref<32x128xbf16, #tpu.memory_space<vmem>>, %arg4: memref<1x128xf32, #tpu.memory_space<vmem>>, %arg5: memref<1x8x128xf32, #tpu.memory_space<vmem>>) attributes {dimension_semantics = [#tpu.dimension_semantics<parallel>], iteration_bounds = array<i64: 2>, scalar_prefetch = 0 : i64, scratch_operands = 0 : i64, tpu.core_type = #tpu.core_type<tc>, window_params = [{transform_indices = @transform_0, window_bounds = array<i64: 1, 8, 32>}, {pipeline_mode = #tpu.pipeline_mode<synchronous>, transform_indices = @transform_1, window_bounds = array<i64: 1, 32>}, {pipeline_mode = #tpu.pipeline_mode<synchronous>, transform_indices = @transform_2, window_bounds = array<i64: 32, 128>}, {pipeline_mode = #tpu.pipeline_mode<synchronous>, transform_indices = @transform_3, window_bounds = array<i64: 1, 128>}, {transform_indices = @transform_4, window_bounds = array<i64: 1, 8, 128>}]} {
    %c0 = arith.constant 0 : index
    %c0_0 = arith.constant 0 : index
    %c0_1 = arith.constant 0 : index
    %0 = vector.load %arg1[%c0, %c0_0, %c0_1] : memref<1x8x32xf32, #tpu.memory_space<vmem>>, vector<1x8x32xf32>
    %1 = vector.shape_cast %0 : vector<1x8x32xf32> to vector<8x32xf32>
    %c0_2 = arith.constant 0 : index
    %c0_3 = arith.constant 0 : index
    %2 = vector.load %arg2[%c0_2, %c0_3] : memref<1x32xf32, #tpu.memory_space<vmem>>, vector<1x32xf32>
    %3 = arith.mulf %1, %1 : vector<8x32xf32>
    %cst = arith.constant dense<0.000000e+00> : vector<8xf32>
    %4 = vector.multi_reduction <add>, %3, %cst [1] : vector<8x32xf32> to vector<8xf32>
    %5 = vector.shape_cast %4 : vector<8xf32> to vector<8x1xf32>
    %cst_4 = arith.constant 3.200000e+01 : f32
    %6 = vector.broadcast %cst_4 : f32 to vector<8x1xf32>
    %7 = arith.divf %5, %6 : vector<8x1xf32>
    %cst_5 = arith.constant 9.99999997E-7 : f32
    %8 = vector.broadcast %cst_5 : f32 to vector<8x1xf32>
    %9 = arith.addf %7, %8 : vector<8x1xf32>
    %10 = math.rsqrt %9 : vector<8x1xf32>
    %11 = vector.broadcast %10 : vector<8x1xf32> to vector<8x32xf32>
    %12 = arith.mulf %1, %11 : vector<8x32xf32>
    %13 = vector.broadcast %2 : vector<1x32xf32> to vector<8x32xf32>
    %14 = arith.mulf %12, %13 : vector<8x32xf32>
    %15 = arith.truncf %14 : vector<8x32xf32> to vector<8x32xbf16>
    %c0_6 = arith.constant 0 : index
    %c0_7 = arith.constant 0 : index
    %16 = vector.load %arg3[%c0_6, %c0_7] : memref<32x128xbf16, #tpu.memory_space<vmem>>, vector<32x128xbf16>
    %cst_8 = arith.constant dense<0.000000e+00> : vector<8x128xf32>
    %17 = tpu.matmul %15, %16, %cst_8 {dimension_numbers = #tpu.dot_dimension_numbers<[1], [0], [0], [1], [0, 0, 1, 1], [], []>} : vector<8x32xbf16>, vector<32x128xbf16>, vector<8x128xf32> -> vector<8x128xf32>
    %c0_9 = arith.constant 0 : index
    %c0_10 = arith.constant 0 : index
    %18 = vector.load %arg4[%c0_9, %c0_10] : memref<1x128xf32, #tpu.memory_space<vmem>>, vector<1x128xf32>
    %19 = vector.broadcast %18 : vector<1x128xf32> to vector<8x128xf32>
    %20 = arith.addf %17, %19 : vector<8x128xf32>
    %c0_11 = arith.constant 0 : index
    %c0_12 = arith.constant 0 : index
    %c0_13 = arith.constant 0 : index
    %21 = vector.load %arg5[%c0_11, %c0_12, %c0_13] : memref<1x8x128xf32, #tpu.memory_space<vmem>>, vector<1x8x128xf32>
    %22 = vector.shape_cast %21 : vector<1x8x128xf32> to vector<8x128xf32>
    %23 = vector.shape_cast %20 : vector<8x128xf32> to vector<1x8x128xf32>
    tpu.vector_store %arg5[%c0_11, %c0_12, %c0_13], %23 {strides = array<i32>} : memref<1x8x128xf32, #tpu.memory_space<vmem>>, vector<1x8x128xf32>,
    return
  }
  func.func @transform_0(%arg0: i32) -> (i32, i32, i32) {
    %c0_i32 = arith.constant 0 : i32
    %c0_i32_0 = arith.constant 0 : i32
    %c0_i32_1 = arith.constant 0 : i32
    return %arg0, %c0_i32, %c0_i32_0 : i32, i32, i32
  }
  func.func @transform_1(%arg0: i32) -> (i32, i32) {
    %c0_i32 = arith.constant 0 : i32
    %c0_i32_0 = arith.constant 0 : i32
    %c0_i32_1 = arith.constant 0 : i32
    return %c0_i32, %c0_i32_0 : i32, i32
  }
  func.func @transform_2(%arg0: i32) -> (i32, i32) {
    %c0_i32 = arith.constant 0 : i32
    %c0_i32_0 = arith.constant 0 : i32
    %c0_i32_1 = arith.constant 0 : i32
    return %c0_i32, %c0_i32_0 : i32, i32
  }
  func.func @transform_3(%arg0: i32) -> (i32, i32) {
    %c0_i32 = arith.constant 0 : i32
    %c0_i32_0 = arith.constant 0 : i32
    %c0_i32_1 = arith.constant 0 : i32
    return %c0_i32, %c0_i32_0 : i32, i32
  }
  func.func @transform_4(%arg0: i32) -> (i32, i32, i32) {
    %c0_i32 = arith.constant 0 : i32
    %c0_i32_0 = arith.constant 0 : i32
    %c0_i32_1 = arith.constant 0 : i32
    return %arg0, %c0_i32, %c0_i32_0 : i32, i32, i32
  }
}

</mosaic_0001>

<llo_original>
// kernel: byt5_with_head_forward.9
$region0: #{byt5_with_head_forward.9}
  #allocation0 [shape = 'u32[]', space=smem, size = 0x4, offset = 0x4, fixed_abs, tag = 'smem constant byte address 0x4 - core index']
  #allocation1 [shape = 'u32[72,128]{1,0:T(1,128)}', space=vmem, size = 0x9000, scoped, tag = 'internal scratch']
  %s0 = inlined_call_operand.vmem [shape: f32[2,8,32], index: 0, kind: input, shape index: {}]
  %s1 = inlined_call_operand.vmem [shape: f32[1,32], index: 1, kind: input, shape index: {}]
  %s2 = inlined_call_operand.vmem [shape: bf16[32,128], index: 2, kind: input, shape index: {}]
  %s3 = inlined_call_operand.vmem [shape: f32[1,128], index: 3, kind: input, shape index: {}]
  %s4 = inlined_call_operand.vmem [shape: f32[2,8,128], index: 4, kind: output, shape index: {}]
  %s5 = sld [smem:[#allocation0]]
  $region49: #{byt5_with_head_forward.9} parent=0
    _
  %s7 = ssub.s32 1, %s5
  %s8 = scalar_select 0, %s7, %s5
  loop: start=0, step=1, limit=4
  $region2: #{byt5_with_head_forward.9} parent=0 // loop_pre_header
    _
  $region3: #{byt5_with_head_forward.9} parent=0 // loop_header
    %s10 = sphi 0, %s14
    %p11 = scmp.ge.s32.totalorder %s10, 4
    %s20 = sphi 0, %s22
    %s23 = sphi 0, %s20
    %s24 = sphi 0, %s23
    %s40 = sphi 0, %s24
    %s44 = sphi 0, %s44
    %s46 = sphi 0, %s44
    %s47 = sphi 0, %s46
    %s61 = sphi 0, %s47
    %s65 = sphi 0, %s65
    %s67 = sphi 0, %s65
    %s68 = sphi 0, %s67
    %s82 = sphi 0, %s68
    %s86 = sphi 0, %s86
    %s88 = sphi 0, %s86
    %s89 = sphi 0, %s88
    %s103 = sphi 0, %s89
    %s109 = sphi 0, %s111
    %s112 = sphi 0, %s109
    %s113 = sphi 0, %s112
    %s129 = sphi 0, %s113
  $region4: #{byt5_with_head_forward.9} parent=0 // loop_header_branch
    %13 = sbr.rel (%p11) target = $region8
  $region5: #{byt5_with_head_forward.9} parent=0 // loop_body
    %s15 = ssub.s32 %s10, 1
    %s16 = ssub.s32 %s10, 2
    %s17 = sadd.s32 %s10, 1
    %s18 = ssub.s32 %s10, %s17
    %p19 = scmp.eq.s32.totalorder %s18, 0
    %s21 = sadd.s32 %s20, 1
    %s22 = scalar_select %p19, %s20, %s21
    %p25 = pneg %p19
    %p26 = scmp.eq.s32.totalorder %s10, 1
    %p27 = por %p25, %p26
    %p28 = scmp.ne.s32.totalorder %s20, %s23
    %p29 = scmp.eq.s32.totalorder %s10, 0
    %p30 = por %p28, %p29
    %p31 = scmp.ne.s32.totalorder %s20, %s23
    %p32 = scmp.eq.s32.totalorder %s15, 1
    %p33 = por %p31, %p32
    %p34 = scmp.ne.s32.totalorder %s23, %s24
    %p35 = scmp.eq.s32.totalorder %s15, 0
    %p36 = por %p34, %p35
    %p37 = scmp.ne.s32.totalorder %s23, %s24
    %p38 = scmp.eq.s32.totalorder %s16, 1
    %p39 = por %p37, %p38
    %p41 = scmp.ne.s32.totalorder %s24, %s40
    %p42 = scmp.eq.s32.totalorder %s16, 0
    %p43 = por %p41, %p42
    %s45 = sadd.s32 %s44, 1
    %p48 = scmp.eq.s32.totalorder %s10, 1
    %p49 = scmp.ne.s32.totalorder %s44, %s46
    %p50 = scmp.eq.s32.totalorder %s10, 0
    %p51 = por %p49, %p50
    %p52 = scmp.ne.s32.totalorder %s44, %s46
    %p53 = scmp.eq.s32.totalorder %s15, 1
    %p54 = por %p52, %p53
    %p55 = scmp.ne.s32.totalorder %s46, %s47
    %p56 = scmp.eq.s32.totalorder %s15, 0
    %p57 = por %p55, %p56
    %p58 = scmp.ne.s32.totalorder %s46, %s47
    %p59 = scmp.eq.s32.totalorder %s16, 1
    %p60 = por %p58, %p59
    %p62 = scmp.ne.s32.totalorder %s47, %s61
    %p63 = scmp.eq.s32.totalorder %s16, 0
    %p64 = por %p62, %p63
    %s66 = sadd.s32 %s65, 1
    %p69 = scmp.eq.s32.totalorder %s10, 1
    %p70 = scmp.ne.s32.totalorder %s65, %s67
    %p71 = scmp.eq.s32.totalorder %s10, 0
    %p72 = por %p70, %p71
    %p73 = scmp.ne.s32.totalorder %s65, %s67
    %p74 = scmp.eq.s32.totalorder %s15, 1
    %p75 = por %p73, %p74
    %p76 = scmp.ne.s32.totalorder %s67, %s68
    %p77 = scmp.eq.s32.totalorder %s15, 0
    %p78 = por %p76, %p77
    %p79 = scmp.ne.s32.totalorder %s67, %s68
    %p80 = scmp.eq.s32.totalorder %s16, 1
    %p81 = por %p79, %p80
    %p83 = scmp.ne.s32.totalorder %s68, %s82
    %p84 = scmp.eq.s32.totalorder %s16, 0
    %p85 = por %p83, %p84
    %s87 = sadd.s32 %s86, 1
    %p90 = scmp.eq.s32.totalorder %s10, 1
    %p91 = scmp.ne.s32.totalorder %s86, %s88
    %p92 = scmp.eq.s32.totalorder %s10, 0
    %p93 = por %p91, %p92
    %p94 = scmp.ne.s32.totalorder %s86, %s88
    %p95 = scmp.eq.s32.totalorder %s15, 1
    %p96 = por %p94, %p95
    %p97 = scmp.ne.s32.totalorder %s88, %s89
    %p98 = scmp.eq.s32.totalorder %s15, 0
    %p99 = por %p97, %p98
    %p100 = scmp.ne.s32.totalorder %s88, %s89
    %p101 = scmp.eq.s32.totalorder %s16, 1
    %p102 = por %p100, %p101
    %p104 = scmp.ne.s32.totalorder %s89, %s103
    %p105 = scmp.eq.s32.totalorder %s16, 0
    %p106 = por %p104, %p105
    %s107 = ssub.s32 %s10, %s17
    %p108 = scmp.eq.s32.totalorder %s107, 0
    %s110 = sadd.s32 %s109, 1
    %s111 = scalar_select %p108, %s109, %s110
    %p114 = pneg %p108
    %p115 = scmp.eq.s32.totalorder %s10, 1
    %p116 = por %p114, %p115
    %p117 = scmp.ne.s32.totalorder %s109, %s112
    %p118 = scmp.eq.s32.totalorder %s10, 0
    %p119 = por %p117, %p118
    %p120 = scmp.ne.s32.totalorder %s109, %s112
    %p121 = scmp.eq.s32.totalorder %s15, 1
    %p122 = por %p120, %p121
    %p123 = scmp.ne.s32.totalorder %s112, %s113
    %p124 = scmp.eq.s32.totalorder %s15, 0
    %p125 = por %p123, %p124
    %p126 = scmp.ne.s32.totalorder %s112, %s113
    %p127 = scmp.eq.s32.totalorder %s16, 1
    %p128 = por %p126, %p127
    %p130 = scmp.ne.s32.totalorder %s113, %s129
    %p131 = scmp.eq.s32.totalorder %s16, 0
    %p132 = por %p130, %p131
    %p133 = scmp.le.s32.totalorder 1, %s10
    %p134 = scmp.lt.s32.totalorder %s10, 3
    %p135 = pnand %p133, %p134
    %p136 = pneg %p135
    // Predicated region
    $region9: #{byt5_with_head_forward.9} parent=5 // pred_check
      _
    $region10: #{byt5_with_head_forward.9} parent=5 // pred_check_branch
      %138 = sbr.rel (%p135) target = $region12
    $region11: #{byt5_with_head_forward.9} parent=5 // pred_region
      %s139 = ssub.s32 %s10, 1
      // Predicated region
      $region13: #{byt5_with_head_forward.9} parent=11 // pred_check
        %p140 = pneg %p57
      $region14: #{byt5_with_head_forward.9} parent=11 // pred_check_branch
        %142 = sbr.rel (%p140) target = $region16
      $region15: #{byt5_with_head_forward.9} parent=11 // pred_region
        _
      $region16: #{byt5_with_head_forward.9} parent=11 // pred_fallthru
        _
      // Predicated region
      $region17: #{byt5_with_head_forward.9} parent=11 // pred_check
        %p143 = pneg %p78
      $region18: #{byt5_with_head_forward.9} parent=11 // pred_check_branch
        %145 = sbr.rel (%p143) target = $region20
      $region19: #{byt5_with_head_forward.9} parent=11 // pred_region
        _
      $region20: #{byt5_with_head_forward.9} parent=11 // pred_fallthru
        _
      // Predicated region
      $region21: #{byt5_with_head_forward.9} parent=11 // pred_check
        %p146 = pneg %p99
      $region22: #{byt5_with_head_forward.9} parent=11 // pred_check_branch
        %148 = sbr.rel (%p146) target = $region24
      $region23: #{byt5_with_head_forward.9} parent=11 // pred_region
        _
      $region24: #{byt5_with_head_forward.9} parent=11 // pred_fallthru
        _
    $region12: #{byt5_with_head_forward.9} parent=5 // pred_fallthru
      _
    %p149 = scmp.lt.s32.totalorder %s10, 2
    // Predicated region
    $region25: #{byt5_with_head_forward.9} parent=5 // pred_check
      %p150 = pneg %p149
    $region26: #{byt5_with_head_forward.9} parent=5 // pred_check_branch
      %152 = sbr.rel (%p150) target = $region28
    $region27: #{byt5_with_head_forward.9} parent=5 // pred_region
      // Predicated region
      $region29: #{byt5_with_head_forward.9} parent=27 // pred_check
        %p153 = pneg %p30
      $region30: #{byt5_with_head_forward.9} parent=27 // pred_check_branch
        %155 = sbr.rel (%p153) target = $region32
      $region31: #{byt5_with_head_forward.9} parent=27 // pred_region
        %p156 = scmp.lt.s32.totalorder %s10, 1
        %s157 = scalar_select %p156, %s10, 1
        %s158 = smul.addr %s157, 8
        %s159 = scalar_lea.vmem %s0, %s158
      $region32: #{byt5_with_head_forward.9} parent=27 // pred_fallthru
        _
    $region28: #{byt5_with_head_forward.9} parent=5 // pred_fallthru
      _
    %p160 = scmp.le.s32.totalorder 1, %s10
    %p161 = scmp.lt.s32.totalorder %s10, 3
    %p162 = pnand %p160, %p161
    %p163 = pneg %p162
    // Predicated region
    $region33: #{byt5_with_head_forward.9} parent=5 // pred_check
      _
    $region34: #{byt5_with_head_forward.9} parent=5 // pred_check_branch
      %165 = sbr.rel (%p162) target = $region36
    $region35: #{byt5_with_head_forward.9} parent=5 // pred_region
      %s166 = ssub.s32 %s10, 1
      %p167 = scmp.lt.s32.totalorder %s15, 1
      %s168 = scalar_select %p167, %s15, 1
      %s169 = smul.addr %s168, 8
      %s170 = scalar_lea.vmem %s0, %s169
      %p171 = pneg %p36
      %p172 = pneg %p33
      %p173 = pneg %p57
      %p174 = pneg %p54
      %p175 = pneg %p78
      %p176 = pneg %p75
      %p177 = pneg %p99
      %p178 = pneg %p96
      %p179 = pneg %p125
      %p180 = pneg %p122
      %p181 = scmp.lt.s32.totalorder %s15, 1
      %s182 = scalar_select %p181, %s15, 1
      %s183 = smul.addr %s182, 8
      %s184 = scalar_lea.vmem %s4, %s183
      %p185 = scmp.lt.s32.totalorder %s15, 1
      %s186 = scalar_select %p185, %s15, 1
      %s187 = smul.addr %s186, 8
      %s188 = scalar_lea.vmem %s0, %s187
      %p189 = scmp.lt.s32.totalorder %s15, 1
      %s190 = scalar_select %p189, %s15, 1
      %s191 = smul.addr %s190, 8
      %s192 = scalar_lea.vmem %s4, %s191
      %v194 = vld [vmem:[%s188] sm:$0xff]
      %v195 = vld [vmem:[%s1] sm:$0x1]
      %v196 = vmul.f32 %v194, %v194
      %vm197 = vcmask 261120
      %v198 = vsel %vm197, %v196, 0.0
      %199 = vadd.xlane.f32.xlu0 %v198
      %v200 = vpop.xlane.xlu0 %199
      %v201 = vrcp.pop 32.0
      %v202 = vmul.f32 32.0, %v201
      %v203 = vsub.f32 1.0, %v202
      %v204 = vmul.f32 %v201, %v203
      %v205 = vadd.f32 %v201, %v204
      %vm206 = vweird.f32 %v201
      %v207 = vsel %vm206, %v201, %v205
      %v208 = vmul.f32 %v200, %v207
      %v209 = vadd.f32 %v208, 1e-06
      %v210 = vrsqrt.pop %v209
      %v211 = vmul.f32 %v210, %v209
      %v212 = vmul.f32 %v211, %v210
      %v213 = vmul.f32 0.5, %v212
      %v214 = vsub.f32 1.5, %v213
      %v215 = vmul.f32 %v210, %v214
      %vm216 = vweird.f32 %v209
      %vm217 = vweird.f32 %v210
      %vm218 = vmor %vm216, %vm217
      %v219 = vsel %vm218, %v210, %v215
      %v220 = vmul.f32 %v194, %v219
      %v222 = vperm.slane %v195, 0
      %v224 = vmul.f32 %v220, %v222
      %v225 = vpack.c.bf16 %v224, %v224
      %v226 = vld [vmem:[%s2] sm:$0xf]
      %v227 = vld [vmem:[%s2 + $0x4] sm:$0xf]
      %v228 = vld [vmem:[%s2 + $0x8] sm:$0xf]
      %v229 = vld [vmem:[%s2 + $0xc] sm:$0xf]
      %v230 = vld [vmem:[%s3] sm:$0x1]
      %v232 = vperm.slane %v230, 0
      %v238 = vunpack.c.l.b16 %v226
      %v239 = vunpack.c.l.b16 %v227
      %v240 = vunpack.c.l.b16 %v228
      %v241 = vunpack.c.l.b16 %v229
      %v242 = vpack.c.b16 %v239, %v238
      %v243 = vpack.c.b16 %v241, %v240
      %v247 = vsel %vm197, %v225, 0
      %249 = vmatpush.bf16.msra.mxu0 0
      %250 = vmatpush.bf16.msra.mxu0 0
      %251 = vmatpush.bf16.msra.mxu0 0
      %252 = vmatpush.bf16.msra.mxu0 0
      %253 = vmatpush.bf16.msra.mxu0 0
      %254 = vmatpush.bf16.msra.mxu0 0
      %255 = vmatpush.bf16.msra.mxu0 %v243
      %256 = vmatpush.bf16.msra.mxu0 %v242
      %257 = vmatmul.bf16.gmra.mxu0 %v247
      %v258 = vpop.f32.mrf.mxu0
      %v259 = vadd.f32 %v232, %v258
      %v260 = vpop.f32.mrf.mxu0
      %261 = vdwg.mxu0
      %262 = vst [vmem:[%s192] sm:$0xff] %v259
      %p263 = scmp.lt.s32.totalorder %s15, 1
      %s264 = scalar_select %p263, %s15, 1
      %s265 = smul.addr %s264, 8
      %s266 = scalar_lea.vmem %s4, %s265
      // Predicated region
      $region37: #{byt5_with_head_forward.9} parent=35 // pred_check
        %p267 = pneg %p122
      $region38: #{byt5_with_head_forward.9} parent=35 // pred_check_branch
        %269 = sbr.rel (%p267) target = $region40
      $region39: #{byt5_with_head_forward.9} parent=35 // pred_region
        _
      $region40: #{byt5_with_head_forward.9} parent=35 // pred_fallthru
        _
    $region36: #{byt5_with_head_forward.9} parent=5 // pred_fallthru
      _
    %p270 = scmp.le.s32.totalorder 2, %s10
    // Predicated region
    $region41: #{byt5_with_head_forward.9} parent=5 // pred_check
      %p271 = pneg %p270
    $region42: #{byt5_with_head_forward.9} parent=5 // pred_check_branch
      %273 = sbr.rel (%p271) target = $region44
    $region43: #{byt5_with_head_forward.9} parent=5 // pred_region
      %s274 = ssub.s32 %s10, 2
      // Predicated region
      $region45: #{byt5_with_head_forward.9} parent=43 // pred_check
        %p275 = pneg %p128
      $region46: #{byt5_with_head_forward.9} parent=43 // pred_check_branch
        %277 = sbr.rel (%p275) target = $region48
      $region47: #{byt5_with_head_forward.9} parent=43 // pred_region
        %p278 = scmp.lt.s32.totalorder %s16, 1
        %s279 = scalar_select %p278, %s16, 1
        %s280 = smul.addr %s279, 8
        %s281 = scalar_lea.vmem %s4, %s280
      $region48: #{byt5_with_head_forward.9} parent=43 // pred_fallthru
        _
    $region44: #{byt5_with_head_forward.9} parent=5 // pred_fallthru
      _
  $region6: #{byt5_with_head_forward.9} parent=0 // loop_footer
    %s14 = sadd.s32 1, %s10
  $region7: #{byt5_with_head_forward.9} parent=0 // loop_footer_branch
    %9 = sbr.rel target = $region3
  $region8: #{byt5_with_head_forward.9} parent=0 // loop_exit
    _

// kernel: byt5_with_head_forward.6
$region0: #{byt5_with_head_forward.6}
  #allocation0 [shape = 'u32[]', space=smem, size = 0x4, offset = 0x4, fixed_abs, tag = 'smem constant byte address 0x4 - core index']
  #allocation1 [shape = 'u32[72,128]{1,0:T(1,128)}', space=vmem, size = 0x9000, scoped, tag = 'internal scratch']
  %s0 = inlined_call_operand.vmem [shape: f32[2,8,32], index: 0, kind: input, shape index: {}]
  %s1 = inlined_call_operand.vmem [shape: f32[1,32], index: 1, kind: input, shape index: {}]
  %s2 = inlined_call_operand.vmem [shape: bf16[32,64], index: 2, kind: input, shape index: {}]
  %s3 = inlined_call_operand.vmem [shape: bf16[32,64], index: 3, kind: input, shape index: {}]
  %s4 = inlined_call_operand.vmem [shape: bf16[64,32], index: 4, kind: input, shape index: {}]
  %s5 = inlined_call_operand.vmem [shape: f32[2,8,32], index: 5, kind: output, shape index: {}]
  %s6 = sld [smem:[#allocation0]]
  $region53: #{byt5_with_head_forward.6} parent=0
    _
  %s8 = ssub.s32 1, %s6
  %s9 = scalar_select 0, %s8, %s6
  loop: start=0, step=1, limit=4
  $region2: #{byt5_with_head_forward.6} parent=0 // loop_pre_header
    _
  $region3: #{byt5_with_head_forward.6} parent=0 // loop_header
    %s11 = sphi 0, %s15
    %p12 = scmp.ge.s32.totalorder %s11, 4
    %s21 = sphi 0, %s23
    %s24 = sphi 0, %s21
    %s25 = sphi 0, %s24
    %s41 = sphi 0, %s25
    %s45 = sphi 0, %s45
    %s47 = sphi 0, %s45
    %s48 = sphi 0, %s47
    %s62 = sphi 0, %s48
    %s66 = sphi 0, %s66
    %s68 = sphi 0, %s66
    %s69 = sphi 0, %s68
    %s83 = sphi 0, %s69
    %s87 = sphi 0, %s87
    %s89 = sphi 0, %s87
    %s90 = sphi 0, %s89
    %s104 = sphi 0, %s90
    %s108 = sphi 0, %s108
    %s110 = sphi 0, %s108
    %s111 = sphi 0, %s110
    %s125 = sphi 0, %s111
    %s131 = sphi 0, %s133
    %s134 = sphi 0, %s131
    %s135 = sphi 0, %s134
    %s151 = sphi 0, %s135
  $region4: #{byt5_with_head_forward.6} parent=0 // loop_header_branch
    %14 = sbr.rel (%p12) target = $region8
  $region5: #{byt5_with_head_forward.6} parent=0 // loop_body
    %s16 = ssub.s32 %s11, 1
    %s17 = ssub.s32 %s11, 2
    %s18 = sadd.s32 %s11, 1
    %s19 = ssub.s32 %s11, %s18
    %p20 = scmp.eq.s32.totalorder %s19, 0
    %s22 = sadd.s32 %s21, 1
    %s23 = scalar_select %p20, %s21, %s22
    %p26 = pneg %p20
    %p27 = scmp.eq.s32.totalorder %s11, 1
    %p28 = por %p26, %p27
    %p29 = scmp.ne.s32.totalorder %s21, %s24
    %p30 = scmp.eq.s32.totalorder %s11, 0
    %p31 = por %p29, %p30
    %p32 = scmp.ne.s32.totalorder %s21, %s24
    %p33 = scmp.eq.s32.totalorder %s16, 1
    %p34 = por %p32, %p33
    %p35 = scmp.ne.s32.totalorder %s24, %s25
    %p36 = scmp.eq.s32.totalorder %s16, 0
    %p37 = por %p35, %p36
    %p38 = scmp.ne.s32.totalorder %s24, %s25
    %p39 = scmp.eq.s32.totalorder %s17, 1
    %p40 = por %p38, %p39
    %p42 = scmp.ne.s32.totalorder %s25, %s41
    %p43 = scmp.eq.s32.totalorder %s17, 0
    %p44 = por %p42, %p43
    %s46 = sadd.s32 %s45, 1
    %p49 = scmp.eq.s32.totalorder %s11, 1
    %p50 = scmp.ne.s32.totalorder %s45, %s47
    %p51 = scmp.eq.s32.totalorder %s11, 0
    %p52 = por %p50, %p51
    %p53 = scmp.ne.s32.totalorder %s45, %s47
    %p54 = scmp.eq.s32.totalorder %s16, 1
    %p55 = por %p53, %p54
    %p56 = scmp.ne.s32.totalorder %s47, %s48
    %p57 = scmp.eq.s32.totalorder %s16, 0
    %p58 = por %p56, %p57
    %p59 = scmp.ne.s32.totalorder %s47, %s48
    %p60 = scmp.eq.s32.totalorder %s17, 1
    %p61 = por %p59, %p60
    %p63 = scmp.ne.s32.totalorder %s48, %s62
    %p64 = scmp.eq.s32.totalorder %s17, 0
    %p65 = por %p63, %p64
    %s67 = sadd.s32 %s66, 1
    %p70 = scmp.eq.s32.totalorder %s11, 1
    %p71 = scmp.ne.s32.totalorder %s66, %s68
    %p72 = scmp.eq.s32.totalorder %s11, 0
    %p73 = por %p71, %p72
    %p74 = scmp.ne.s32.totalorder %s66, %s68
    %p75 = scmp.eq.s32.totalorder %s16, 1
    %p76 = por %p74, %p75
    %p77 = scmp.ne.s32.totalorder %s68, %s69
    %p78 = scmp.eq.s32.totalorder %s16, 0
    %p79 = por %p77, %p78
    %p80 = scmp.ne.s32.totalorder %s68, %s69
    %p81 = scmp.eq.s32.totalorder %s17, 1
    %p82 = por %p80, %p81
    %p84 = scmp.ne.s32.totalorder %s69, %s83
    %p85 = scmp.eq.s32.totalorder %s17, 0
    %p86 = por %p84, %p85
    %s88 = sadd.s32 %s87, 1
    %p91 = scmp.eq.s32.totalorder %s11, 1
    %p92 = scmp.ne.s32.totalorder %s87, %s89
    %p93 = scmp.eq.s32.totalorder %s11, 0
    %p94 = por %p92, %p93
    %p95 = scmp.ne.s32.totalorder %s87, %s89
    %p96 = scmp.eq.s32.totalorder %s16, 1
    %p97 = por %p95, %p96
    %p98 = scmp.ne.s32.totalorder %s89, %s90
    %p99 = scmp.eq.s32.totalorder %s16, 0
    %p100 = por %p98, %p99
    %p101 = scmp.ne.s32.totalorder %s89, %s90
    %p102 = scmp.eq.s32.totalorder %s17, 1
    %p103 = por %p101, %p102
    %p105 = scmp.ne.s32.totalorder %s90, %s104
    %p106 = scmp.eq.s32.totalorder %s17, 0
    %p107 = por %p105, %p106
    %s109 = sadd.s32 %s108, 1
    %p112 = scmp.eq.s32.totalorder %s11, 1
    %p113 = scmp.ne.s32.totalorder %s108, %s110
    %p114 = scmp.eq.s32.totalorder %s11, 0
    %p115 = por %p113, %p114
    %p116 = scmp.ne.s32.totalorder %s108, %s110
    %p117 = scmp.eq.s32.totalorder %s16, 1
    %p118 = por %p116, %p117
    %p119 = scmp.ne.s32.totalorder %s110, %s111
    %p120 = scmp.eq.s32.totalorder %s16, 0
    %p121 = por %p119, %p120
    %p122 = scmp.ne.s32.totalorder %s110, %s111
    %p123 = scmp.eq.s32.totalorder %s17, 1
    %p124 = por %p122, %p123
    %p126 = scmp.ne.s32.totalorder %s111, %s125
    %p127 = scmp.eq.s32.totalorder %s17, 0
    %p128 = por %p126, %p127
    %s129 = ssub.s32 %s11, %s18
    %p130 = scmp.eq.s32.totalorder %s129, 0
    %s132 = sadd.s32 %s131, 1
    %s133 = scalar_select %p130, %s131, %s132
    %p136 = pneg %p130
    %p137 = scmp.eq.s32.totalorder %s11, 1
    %p138 = por %p136, %p137
    %p139 = scmp.ne.s32.totalorder %s131, %s134
    %p140 = scmp.eq.s32.totalorder %s11, 0
    %p141 = por %p139, %p140
    %p142 = scmp.ne.s32.totalorder %s131, %s134
    %p143 = scmp.eq.s32.totalorder %s16, 1
    %p144 = por %p142, %p143
    %p145 = scmp.ne.s32.totalorder %s134, %s135
    %p146 = scmp.eq.s32.totalorder %s16, 0
    %p147 = por %p145, %p146
    %p148 = scmp.ne.s32.totalorder %s134, %s135
    %p149 = scmp.eq.s32.totalorder %s17, 1
    %p150 = por %p148, %p149
    %p152 = scmp.ne.s32.totalorder %s135, %s151
    %p153 = scmp.eq.s32.totalorder %s17, 0
    %p154 = por %p152, %p153
    %p155 = scmp.le.s32.totalorder 1, %s11
    %p156 = scmp.lt.s32.totalorder %s11, 3
    %p157 = pnand %p155, %p156
    %p158 = pneg %p157
    // Predicated region
    $region9: #{byt5_with_head_forward.6} parent=5 // pred_check
      _
    $region10: #{byt5_with_head_forward.6} parent=5 // pred_check_branch
      %160 = sbr.rel (%p157) target = $region12
    $region11: #{byt5_with_head_forward.6} parent=5 // pred_region
      %s161 = ssub.s32 %s11, 1
      // Predicated region
      $region13: #{byt5_with_head_forward.6} parent=11 // pred_check
        %p162 = pneg %p58
      $region14: #{byt5_with_head_forward.6} parent=11 // pred_check_branch
        %164 = sbr.rel (%p162) target = $region16
      $region15: #{byt5_with_head_forward.6} parent=11 // pred_region
        _
      $region16: #{byt5_with_head_forward.6} parent=11 // pred_fallthru
        _
      // Predicated region
      $region17: #{byt5_with_head_forward.6} parent=11 // pred_check
        %p165 = pneg %p79
      $region18: #{byt5_with_head_forward.6} parent=11 // pred_check_branch
        %167 = sbr.rel (%p165) target = $region20
      $region19: #{byt5_with_head_forward.6} parent=11 // pred_region
        _
      $region20: #{byt5_with_head_forward.6} parent=11 // pred_fallthru
        _
      // Predicated region
      $region21: #{byt5_with_head_forward.6} parent=11 // pred_check
        %p168 = pneg %p100
      $region22: #{byt5_with_head_forward.6} parent=11 // pred_check_branch
        %170 = sbr.rel (%p168) target = $region24
      $region23: #{byt5_with_head_forward.6} parent=11 // pred_region
        _
      $region24: #{byt5_with_head_forward.6} parent=11 // pred_fallthru
        _
      // Predicated region
      $region25: #{byt5_with_head_forward.6} parent=11 // pred_check
        %p171 = pneg %p121
      $region26: #{byt5_with_head_forward.6} parent=11 // pred_check_branch
        %173 = sbr.rel (%p171) target = $region28
      $region27: #{byt5_with_head_forward.6} parent=11 // pred_region
        _
      $region28: #{byt5_with_head_forward.6} parent=11 // pred_fallthru
        _
    $region12: #{byt5_with_head_forward.6} parent=5 // pred_fallthru
      _
    %p174 = scmp.lt.s32.totalorder %s11, 2
    // Predicated region
    $region29: #{byt5_with_head_forward.6} parent=5 // pred_check
      %p175 = pneg %p174
    $region30: #{byt5_with_head_forward.6} parent=5 // pred_check_branch
      %177 = sbr.rel (%p175) target = $region32
    $region31: #{byt5_with_head_forward.6} parent=5 // pred_region
      // Predicated region
      $region33: #{byt5_with_head_forward.6} parent=31 // pred_check
        %p178 = pneg %p31
      $region34: #{byt5_with_head_forward.6} parent=31 // pred_check_branch
        %180 = sbr.rel (%p178) target = $region36
      $region35: #{byt5_with_head_forward.6} parent=31 // pred_region
        %p181 = scmp.lt.s32.totalorder %s11, 1
        %s182 = scalar_select %p181, %s11, 1
        %s183 = smul.addr %s182, 8
        %s184 = scalar_lea.vmem %s0, %s183
      $region36: #{byt5_with_head_forward.6} parent=31 // pred_fallthru
        _
    $region32: #{byt5_with_head_forward.6} parent=5 // pred_fallthru
      _
    %p185 = scmp.le.s32.totalorder 1, %s11
    %p186 = scmp.lt.s32.totalorder %s11, 3
    %p187 = pnand %p185, %p186
    %p188 = pneg %p187
    // Predicated region
    $region37: #{byt5_with_head_forward.6} parent=5 // pred_check
      _
    $region38: #{byt5_with_head_forward.6} parent=5 // pred_check_branch
      %190 = sbr.rel (%p187) target = $region40
    $region39: #{byt5_with_head_forward.6} parent=5 // pred_region
      %s191 = ssub.s32 %s11, 1
      %p192 = scmp.lt.s32.totalorder %s16, 1
      %s193 = scalar_select %p192, %s16, 1
      %s194 = smul.addr %s193, 8
      %s195 = scalar_lea.vmem %s0, %s194
      %p196 = pneg %p37
      %p197 = pneg %p34
      %p198 = pneg %p58
      %p199 = pneg %p55
      %p200 = pneg %p79
      %p201 = pneg %p76
      %p202 = pneg %p100
      %p203 = pneg %p97
      %p204 = pneg %p121
      %p205 = pneg %p118
      %p206 = pneg %p147
      %p207 = pneg %p144
      %p208 = scmp.lt.s32.totalorder %s16, 1
      %s209 = scalar_select %p208, %s16, 1
      %s210 = smul.addr %s209, 8
      %s211 = scalar_lea.vmem %s5, %s210
      %p212 = scmp.lt.s32.totalorder %s16, 1
      %s213 = scalar_select %p212, %s16, 1
      %s214 = smul.addr %s213, 8
      %s215 = scalar_lea.vmem %s0, %s214
      %p216 = scmp.lt.s32.totalorder %s16, 1
      %s217 = scalar_select %p216, %s16, 1
      %s218 = smul.addr %s217, 8
      %s219 = scalar_lea.vmem %s5, %s218
      %v221 = vld [vmem:[%s215] sm:$0xff]
      %v222 = vld [vmem:[%s1] sm:$0x1]
      %v223 = vmul.f32 %v221, %v221
      %vm224 = vcmask 261120
      %v225 = vsel %vm224, %v223, 0.0
      %226 = vadd.xlane.f32.xlu0 %v225
      %v227 = vpop.xlane.xlu0 %226
      %v228 = vrcp.pop 32.0
      %v229 = vmul.f32 32.0, %v228
      %v230 = vsub.f32 1.0, %v229
      %v231 = vmul.f32 %v228, %v230
      %v232 = vadd.f32 %v228, %v231
      %vm233 = vweird.f32 %v228
      %v234 = vsel %vm233, %v228, %v232
      %v235 = vmul.f32 %v227, %v234
      %v236 = vadd.f32 %v235, 1e-06
      %v237 = vrsqrt.pop %v236
      %v238 = vmul.f32 %v237, %v236
      %v239 = vmul.f32 %v238, %v237
      %v240 = vmul.f32 0.5, %v239
      %v241 = vsub.f32 1.5, %v240
      %v242 = vmul.f32 %v237, %v241
      %vm243 = vweird.f32 %v236
      %vm244 = vweird.f32 %v237
      %vm245 = vmor %vm243, %vm244
      %v246 = vsel %vm245, %v237, %v242
      %v247 = vmul.f32 %v221, %v246
      %v249 = vperm.slane %v222, 0
      %v251 = vmul.f32 %v247, %v249
      %v252 = vpack.c.bf16 %v251, %v251
      %v253 = vld [vmem:[%s2] sm:$0xf]
      %v254 = vld [vmem:[%s2 + $0x4] sm:$0xf]
      %v255 = vld [vmem:[%s2 + $0x8] sm:$0xf]
      %v256 = vld [vmem:[%s2 + $0xc] sm:$0xf]
      %v261 = vunpack.c.l.b16 %v253
      %v262 = vunpack.c.l.b16 %v254
      %v263 = vunpack.c.l.b16 %v255
      %v264 = vunpack.c.l.b16 %v256
      %v265 = vpack.c.b16 %v262, %v261
      %v266 = vpack.c.b16 %v264, %v263
      %v270 = vsel %vm224, %v252, 0
      %272 = vmatpush.bf16.msra.mxu0 0
      %273 = vmatpush.bf16.msra.mxu0 0
      %274 = vmatpush.bf16.msra.mxu0 0
      %275 = vmatpush.bf16.msra.mxu0 0
      %276 = vmatpush.bf16.msra.mxu0 0
      %277 = vmatpush.bf16.msra.mxu0 0
      %278 = vmatpush.bf16.msra.mxu0 %v266
      %279 = vmatpush.bf16.msra.mxu0 %v265
      %280 = vmatmul.bf16.gmra.mxu0 %v270
      %v281 = vpop.f32.mrf.mxu0
      %v282 = vadd.f32 0.0, %v281
      %v283 = vpop.f32.mrf.mxu0
      %284 = vdwg.mxu0
      %v285 = vmul.f32 %v282, %v282
      %v286 = vmul.f32 %v282, %v285
      %v287 = vmul.f32 %v286, 0.044715
      %v288 = vadd.f32 %v282, %v287
      %v289 = vmul.f32 %v288, 0.7978846
      %v290 = vtanh.pop %v289
      %v291 = vadd.f32 %v290, 1.0
      %v292 = vmul.f32 %v291, 0.5
      %v293 = vmul.f32 %v282, %v292
      %v294 = vld [vmem:[%s3] sm:$0xf]
      %v295 = vld [vmem:[%s3 + $0x4] sm:$0xf]
      %v296 = vld [vmem:[%s3 + $0x8] sm:$0xf]
      %v297 = vld [vmem:[%s3 + $0xc] sm:$0xf]
      %v302 = vunpack.c.l.b16 %v294
      %v303 = vunpack.c.l.b16 %v295
      %v304 = vunpack.c.l.b16 %v296
      %v305 = vunpack.c.l.b16 %v297
      %v306 = vpack.c.b16 %v303, %v302
      %v307 = vpack.c.b16 %v305, %v304
      %310 = vmatpush.bf16.msra.mxu0 0
      %311 = vmatpush.bf16.msra.mxu0 0
      %312 = vmatpush.bf16.msra.mxu0 0
      %313 = vmatpush.bf16.msra.mxu0 0
      %314 = vmatpush.bf16.msra.mxu0 0
      %315 = vmatpush.bf16.msra.mxu0 0
      %316 = vmatpush.bf16.msra.mxu0 %v307
      %317 = vmatpush.bf16.msra.mxu0 %v306
      %318 = vmatmul.bf16.gmra.mxu0 %v270
      %v319 = vpop.f32.mrf.mxu0
      %v320 = vadd.f32 0.0, %v319
      %v321 = vpop.f32.mrf.mxu0
      %322 = vdwg.mxu0
      %v323 = vmul.f32 %v293, %v320
      %v324 = vpack.c.bf16 %v323, %v323
      %v325 = vld [vmem:[%s4] sm:$0xf]
      %v326 = vld [vmem:[%s4 + $0x4] sm:$0xf]
      %v327 = vld [vmem:[%s4 + $0x8] sm:$0xf]
      %v328 = vld [vmem:[%s4 + $0xc] sm:$0xf]
      %v329 = vld [vmem:[%s4 + $0x10] sm:$0xf]
      %v330 = vld [vmem:[%s4 + $0x14] sm:$0xf]
      %v331 = vld [vmem:[%s4 + $0x18] sm:$0xf]
      %v332 = vld [vmem:[%s4 + $0x1c] sm:$0xf]
      %v341 = vunpack.c.l.b16 %v325
      %v342 = vunpack.c.l.b16 %v326
      %v343 = vunpack.c.l.b16 %v327
      %v344 = vunpack.c.l.b16 %v328
      %v345 = vunpack.c.l.b16 %v329
      %v346 = vunpack.c.l.b16 %v330
      %v347 = vunpack.c.l.b16 %v331
      %v348 = vunpack.c.l.b16 %v332
      %v349 = vpack.c.b16 %v342, %v341
      %v350 = vpack.c.b16 %v344, %v343
      %v351 = vpack.c.b16 %v346, %v345
      %v352 = vpack.c.b16 %v348, %v347
      %vm357 = vcmask 523264
      %v359 = vsel %vm357, %v324, 0
      %361 = vmatpush.bf16.msra.mxu0 0
      %362 = vmatpush.bf16.msra.mxu0 0
      %363 = vmatpush.bf16.msra.mxu0 0
      %364 = vmatpush.bf16.msra.mxu0 0
      %365 = vmatpush.bf16.msra.mxu0 %v352
      %366 = vmatpush.bf16.msra.mxu0 %v351
      %367 = vmatpush.bf16.msra.mxu0 %v350
      %368 = vmatpush.bf16.msra.mxu0 %v349
      %369 = vmatmul.bf16.gmra.mxu0 %v359
      %v370 = vpop.f32.mrf.mxu0
      %v371 = vadd.f32 0.0, %v370
      %v372 = vpop.f32.mrf.mxu0
      %373 = vdwg.mxu0
      %v374 = vadd.f32 %v221, %v371
      %375 = vst.msk [vmem:[%s219] sm:$0xff] %vm224, %v374
      %p376 = scmp.lt.s32.totalorder %s16, 1
      %s377 = scalar_select %p376, %s16, 1
      %s378 = smul.addr %s377, 8
      %s379 = scalar_lea.vmem %s5, %s378
      // Predicated region
      $region41: #{byt5_with_head_forward.6} parent=39 // pred_check
        %p380 = pneg %p144
      $region42: #{byt5_with_head_forward.6} parent=39 // pred_check_branch
        %382 = sbr.rel (%p380) target = $region44
      $region43: #{byt5_with_head_forward.6} parent=39 // pred_region
        _
      $region44: #{byt5_with_head_forward.6} parent=39 // pred_fallthru
        _
    $region40: #{byt5_with_head_forward.6} parent=5 // pred_fallthru
      _
    %p383 = scmp.le.s32.totalorder 2, %s11
    // Predicated region
    $region45: #{byt5_with_head_forward.6} parent=5 // pred_check
      %p384 = pneg %p383
    $region46: #{byt5_with_head_forward.6} parent=5 // pred_check_branch
      %386 = sbr.rel (%p384) target = $region48
    $region47: #{byt5_with_head_forward.6} parent=5 // pred_region
      %s387 = ssub.s32 %s11, 2
      // Predicated region
      $region49: #{byt5_with_head_forward.6} parent=47 // pred_check
        %p388 = pneg %p150
      $region50: #{byt5_with_head_forward.6} parent=47 // pred_check_branch
        %390 = sbr.rel (%p388) target = $region52
      $region51: #{byt5_with_head_forward.6} parent=47 // pred_region
        %p391 = scmp.lt.s32.totalorder %s17, 1
        %s392 = scalar_select %p391, %s17, 1
        %s393 = smul.addr %s392, 8
        %s394 = scalar_lea.vmem %s5, %s393
      $region52: #{byt5_with_head_forward.6} parent=47 // pred_fallthru
        _
    $region48: #{byt5_with_head_forward.6} parent=5 // pred_fallthru
      _
  $region6: #{byt5_with_head_forward.6} parent=0 // loop_footer
    %s15 = sadd.s32 1, %s11
  $region7: #{byt5_with_head_forward.6} parent=0 // loop_footer_branch
    %10 = sbr.rel target = $region3
  $region8: #{byt5_with_head_forward.6} parent=0 // loop_exit
    _

// kernel: byt5_with_head_forward.5
$region0: #{byt5_with_head_forward.5}
  #allocation0 [shape = 'u32[]', space=smem, size = 0x4, offset = 0x4, fixed_abs, tag = 'smem constant byte address 0x4 - core index']
  #allocation1 [shape = 'u32[72,128]{1,0:T(1,128)}', space=vmem, size = 0x9000, scoped, tag = 'internal scratch']
  %s0 = inlined_call_operand.vmem [shape: f32[2,8,32], index: 0, kind: input, shape index: {}]
  %s1 = inlined_call_operand.vmem [shape: f32[1,32], index: 1, kind: input, shape index: {}]
  %s2 = inlined_call_operand.vmem [shape: bf16[32,96], index: 2, kind: input, shape index: {}]
  %s3 = inlined_call_operand.vmem [shape: bf16[32,32], index: 3, kind: input, shape index: {}]
  %s4 = inlined_call_operand.vmem [shape: f32[4,8,8], index: 4, kind: input, shape index: {}]
  %s5 = inlined_call_operand.vmem [shape: f32[2,1,8], index: 5, kind: input, shape index: {}]
  %s6 = inlined_call_operand.vmem [shape: f32[2,8,32], index: 6, kind: output, shape index: {}]
  %s7 = sld [smem:[#allocation0]]
  $region57: #{byt5_with_head_forward.5} parent=0
    _
  %s9 = ssub.s32 1, %s7
  %s10 = scalar_select 0, %s9, %s7
  loop: start=0, step=1, limit=4
  $region2: #{byt5_with_head_forward.5} parent=0 // loop_pre_header
    _
  $region3: #{byt5_with_head_forward.5} parent=0 // loop_header
    %s12 = sphi 0, %s16
    %p13 = scmp.ge.s32.totalorder %s12, 4
    %s22 = sphi 0, %s24
    %s25 = sphi 0, %s22
    %s26 = sphi 0, %s25
    %s42 = sphi 0, %s26
    %s46 = sphi 0, %s46
    %s48 = sphi 0, %s46
    %s49 = sphi 0, %s48
    %s63 = sphi 0, %s49
    %s67 = sphi 0, %s67
    %s69 = sphi 0, %s67
    %s70 = sphi 0, %s69
    %s84 = sphi 0, %s70
    %s88 = sphi 0, %s88
    %s90 = sphi 0, %s88
    %s91 = sphi 0, %s90
    %s105 = sphi 0, %s91
    %s109 = sphi 0, %s109
    %s111 = sphi 0, %s109
    %s112 = sphi 0, %s111
    %s126 = sphi 0, %s112
    %s132 = sphi 0, %s134
    %s135 = sphi 0, %s132
    %s136 = sphi 0, %s135
    %s152 = sphi 0, %s136
    %s158 = sphi 0, %s160
    %s161 = sphi 0, %s158
    %s162 = sphi 0, %s161
    %s178 = sphi 0, %s162
  $region4: #{byt5_with_head_forward.5} parent=0 // loop_header_branch
    %15 = sbr.rel (%p13) target = $region8
  $region5: #{byt5_with_head_forward.5} parent=0 // loop_body
    %s17 = ssub.s32 %s12, 1
    %s18 = ssub.s32 %s12, 2
    %s19 = sadd.s32 %s12, 1
    %s20 = ssub.s32 %s12, %s19
    %p21 = scmp.eq.s32.totalorder %s20, 0
    %s23 = sadd.s32 %s22, 1
    %s24 = scalar_select %p21, %s22, %s23
    %p27 = pneg %p21
    %p28 = scmp.eq.s32.totalorder %s12, 1
    %p29 = por %p27, %p28
    %p30 = scmp.ne.s32.totalorder %s22, %s25
    %p31 = scmp.eq.s32.totalorder %s12, 0
    %p32 = por %p30, %p31
    %p33 = scmp.ne.s32.totalorder %s22, %s25
    %p34 = scmp.eq.s32.totalorder %s17, 1
    %p35 = por %p33, %p34
    %p36 = scmp.ne.s32.totalorder %s25, %s26
    %p37 = scmp.eq.s32.totalorder %s17, 0
    %p38 = por %p36, %p37
    %p39 = scmp.ne.s32.totalorder %s25, %s26
    %p40 = scmp.eq.s32.totalorder %s18, 1
    %p41 = por %p39, %p40
    %p43 = scmp.ne.s32.totalorder %s26, %s42
    %p44 = scmp.eq.s32.totalorder %s18, 0
    %p45 = por %p43, %p44
    %s47 = sadd.s32 %s46, 1
    %p50 = scmp.eq.s32.totalorder %s12, 1
    %p51 = scmp.ne.s32.totalorder %s46, %s48
    %p52 = scmp.eq.s32.totalorder %s12, 0
    %p53 = por %p51, %p52
    %p54 = scmp.ne.s32.totalorder %s46, %s48
    %p55 = scmp.eq.s32.totalorder %s17, 1
    %p56 = por %p54, %p55
    %p57 = scmp.ne.s32.totalorder %s48, %s49
    %p58 = scmp.eq.s32.totalorder %s17, 0
    %p59 = por %p57, %p58
    %p60 = scmp.ne.s32.totalorder %s48, %s49
    %p61 = scmp.eq.s32.totalorder %s18, 1
    %p62 = por %p60, %p61
    %p64 = scmp.ne.s32.totalorder %s49, %s63
    %p65 = scmp.eq.s32.totalorder %s18, 0
    %p66 = por %p64, %p65
    %s68 = sadd.s32 %s67, 1
    %p71 = scmp.eq.s32.totalorder %s12, 1
    %p72 = scmp.ne.s32.totalorder %s67, %s69
    %p73 = scmp.eq.s32.totalorder %s12, 0
    %p74 = por %p72, %p73
    %p75 = scmp.ne.s32.totalorder %s67, %s69
    %p76 = scmp.eq.s32.totalorder %s17, 1
    %p77 = por %p75, %p76
    %p78 = scmp.ne.s32.totalorder %s69, %s70
    %p79 = scmp.eq.s32.totalorder %s17, 0
    %p80 = por %p78, %p79
    %p81 = scmp.ne.s32.totalorder %s69, %s70
    %p82 = scmp.eq.s32.totalorder %s18, 1
    %p83 = por %p81, %p82
    %p85 = scmp.ne.s32.totalorder %s70, %s84
    %p86 = scmp.eq.s32.totalorder %s18, 0
    %p87 = por %p85, %p86
    %s89 = sadd.s32 %s88, 1
    %p92 = scmp.eq.s32.totalorder %s12, 1
    %p93 = scmp.ne.s32.totalorder %s88, %s90
    %p94 = scmp.eq.s32.totalorder %s12, 0
    %p95 = por %p93, %p94
    %p96 = scmp.ne.s32.totalorder %s88, %s90
    %p97 = scmp.eq.s32.totalorder %s17, 1
    %p98 = por %p96, %p97
    %p99 = scmp.ne.s32.totalorder %s90, %s91
    %p100 = scmp.eq.s32.totalorder %s17, 0
    %p101 = por %p99, %p100
    %p102 = scmp.ne.s32.totalorder %s90, %s91
    %p103 = scmp.eq.s32.totalorder %s18, 1
    %p104 = por %p102, %p103
    %p106 = scmp.ne.s32.totalorder %s91, %s105
    %p107 = scmp.eq.s32.totalorder %s18, 0
    %p108 = por %p106, %p107
    %s110 = sadd.s32 %s109, 1
    %p113 = scmp.eq.s32.totalorder %s12, 1
    %p114 = scmp.ne.s32.totalorder %s109, %s111
    %p115 = scmp.eq.s32.totalorder %s12, 0
    %p116 = por %p114, %p115
    %p117 = scmp.ne.s32.totalorder %s109, %s111
    %p118 = scmp.eq.s32.totalorder %s17, 1
    %p119 = por %p117, %p118
    %p120 = scmp.ne.s32.totalorder %s111, %s112
    %p121 = scmp.eq.s32.totalorder %s17, 0
    %p122 = por %p120, %p121
    %p123 = scmp.ne.s32.totalorder %s111, %s112
    %p124 = scmp.eq.s32.totalorder %s18, 1
    %p125 = por %p123, %p124
    %p127 = scmp.ne.s32.totalorder %s112, %s126
    %p128 = scmp.eq.s32.totalorder %s18, 0
    %p129 = por %p127, %p128
    %s130 = ssub.s32 %s12, %s19
    %p131 = scmp.eq.s32.totalorder %s130, 0
    %s133 = sadd.s32 %s132, 1
    %s134 = scalar_select %p131, %s132, %s133
    %p137 = pneg %p131
    %p138 = scmp.eq.s32.totalorder %s12, 1
    %p139 = por %p137, %p138
    %p140 = scmp.ne.s32.totalorder %s132, %s135
    %p141 = scmp.eq.s32.totalorder %s12, 0
    %p142 = por %p140, %p141
    %p143 = scmp.ne.s32.totalorder %s132, %s135
    %p144 = scmp.eq.s32.totalorder %s17, 1
    %p145 = por %p143, %p144
    %p146 = scmp.ne.s32.totalorder %s135, %s136
    %p147 = scmp.eq.s32.totalorder %s17, 0
    %p148 = por %p146, %p147
    %p149 = scmp.ne.s32.totalorder %s135, %s136
    %p150 = scmp.eq.s32.totalorder %s18, 1
    %p151 = por %p149, %p150
    %p153 = scmp.ne.s32.totalorder %s136, %s152
    %p154 = scmp.eq.s32.totalorder %s18, 0
    %p155 = por %p153, %p154
    %s156 = ssub.s32 %s12, %s19
    %p157 = scmp.eq.s32.totalorder %s156, 0
    %s159 = sadd.s32 %s158, 1
    %s160 = scalar_select %p157, %s158, %s159
    %p163 = pneg %p157
    %p164 = scmp.eq.s32.totalorder %s12, 1
    %p165 = por %p163, %p164
    %p166 = scmp.ne.s32.totalorder %s158, %s161
    %p167 = scmp.eq.s32.totalorder %s12, 0
    %p168 = por %p166, %p167
    %p169 = scmp.ne.s32.totalorder %s158, %s161
    %p170 = scmp.eq.s32.totalorder %s17, 1
    %p171 = por %p169, %p170
    %p172 = scmp.ne.s32.totalorder %s161, %s162
    %p173 = scmp.eq.s32.totalorder %s17, 0
    %p174 = por %p172, %p173
    %p175 = scmp.ne.s32.totalorder %s161, %s162
    %p176 = scmp.eq.s32.totalorder %s18, 1
    %p177 = por %p175, %p176
    %p179 = scmp.ne.s32.totalorder %s162, %s178
    %p180 = scmp.eq.s32.totalorder %s18, 0
    %p181 = por %p179, %p180
    %p182 = scmp.le.s32.totalorder 1, %s12
    %p183 = scmp.lt.s32.totalorder %s12, 3
    %p184 = pnand %p182, %p183
    %p185 = pneg %p184
    // Predicated region
    $region9: #{byt5_with_head_forward.5} parent=5 // pred_check
      _
    $region10: #{byt5_with_head_forward.5} parent=5 // pred_check_branch
      %187 = sbr.rel (%p184) target = $region12
    $region11: #{byt5_with_head_forward.5} parent=5 // pred_region
      %s188 = ssub.s32 %s12, 1
      // Predicated region
      $region13: #{byt5_with_head_forward.5} parent=11 // pred_check
        %p189 = pneg %p59
      $region14: #{byt5_with_head_forward.5} parent=11 // pred_check_branch
        %191 = sbr.rel (%p189) target = $region16
      $region15: #{byt5_with_head_forward.5} parent=11 // pred_region
        _
      $region16: #{byt5_with_head_forward.5} parent=11 // pred_fallthru
        _
      // Predicated region
      $region17: #{byt5_with_head_forward.5} parent=11 // pred_check
        %p192 = pneg %p80
      $region18: #{byt5_with_head_forward.5} parent=11 // pred_check_branch
        %194 = sbr.rel (%p192) target = $region20
      $region19: #{byt5_with_head_forward.5} parent=11 // pred_region
        _
      $region20: #{byt5_with_head_forward.5} parent=11 // pred_fallthru
        _
      // Predicated region
      $region21: #{byt5_with_head_forward.5} parent=11 // pred_check
        %p195 = pneg %p101
      $region22: #{byt5_with_head_forward.5} parent=11 // pred_check_branch
        %197 = sbr.rel (%p195) target = $region24
      $region23: #{byt5_with_head_forward.5} parent=11 // pred_region
        _
      $region24: #{byt5_with_head_forward.5} parent=11 // pred_fallthru
        _
      // Predicated region
      $region25: #{byt5_with_head_forward.5} parent=11 // pred_check
        %p198 = pneg %p122
      $region26: #{byt5_with_head_forward.5} parent=11 // pred_check_branch
        %200 = sbr.rel (%p198) target = $region28
      $region27: #{byt5_with_head_forward.5} parent=11 // pred_region
        _
      $region28: #{byt5_with_head_forward.5} parent=11 // pred_fallthru
        _
    $region12: #{byt5_with_head_forward.5} parent=5 // pred_fallthru
      _
    %p201 = scmp.lt.s32.totalorder %s12, 2
    // Predicated region
    $region29: #{byt5_with_head_forward.5} parent=5 // pred_check
      %p202 = pneg %p201
    $region30: #{byt5_with_head_forward.5} parent=5 // pred_check_branch
      %204 = sbr.rel (%p202) target = $region32
    $region31: #{byt5_with_head_forward.5} parent=5 // pred_region
      // Predicated region
      $region33: #{byt5_with_head_forward.5} parent=31 // pred_check
        %p205 = pneg %p32
      $region34: #{byt5_with_head_forward.5} parent=31 // pred_check_branch
        %207 = sbr.rel (%p205) target = $region36
      $region35: #{byt5_with_head_forward.5} parent=31 // pred_region
        %p208 = scmp.lt.s32.totalorder %s12, 1
        %s209 = scalar_select %p208, %s12, 1
        %s210 = smul.addr %s209, 8
        %s211 = scalar_lea.vmem %s0, %s210
      $region36: #{byt5_with_head_forward.5} parent=31 // pred_fallthru
        _
      // Predicated region
      $region37: #{byt5_with_head_forward.5} parent=31 // pred_check
        %p212 = pneg %p142
      $region38: #{byt5_with_head_forward.5} parent=31 // pred_check_branch
        %214 = sbr.rel (%p212) target = $region40
      $region39: #{byt5_with_head_forward.5} parent=31 // pred_region
        %p215 = scmp.lt.s32.totalorder %s12, 1
        %s216 = scalar_select %p215, %s12, 1
        %s217 = scalar_lea.vmem %s5, %s216
      $region40: #{byt5_with_head_forward.5} parent=31 // pred_fallthru
        _
    $region32: #{byt5_with_head_forward.5} parent=5 // pred_fallthru
      _
    %p218 = scmp.le.s32.totalorder 1, %s12
    %p219 = scmp.lt.s32.totalorder %s12, 3
    %p220 = pnand %p218, %p219
    %p221 = pneg %p220
    // Predicated region
    $region41: #{byt5_with_head_forward.5} parent=5 // pred_check
      _
    $region42: #{byt5_with_head_forward.5} parent=5 // pred_check_branch
      %223 = sbr.rel (%p220) target = $region44
    $region43: #{byt5_with_head_forward.5} parent=5 // pred_region
      %s224 = ssub.s32 %s12, 1
      %p225 = scmp.lt.s32.totalorder %s17, 1
      %s226 = scalar_select %p225, %s17, 1
      %s227 = smul.addr %s226, 8
      %s228 = scalar_lea.vmem %s0, %s227
      %p229 = pneg %p38
      %p230 = pneg %p35
      %p231 = pneg %p59
      %p232 = pneg %p56
      %p233 = pneg %p80
      %p234 = pneg %p77
      %p235 = pneg %p101
      %p236 = pneg %p98
      %p237 = pneg %p122
      %p238 = pneg %p119
      %p239 = scmp.lt.s32.totalorder %s17, 1
      %s240 = scalar_select %p239, %s17, 1
      %s241 = scalar_lea.vmem %s5, %s240
      %p242 = pneg %p148
      %p243 = pneg %p145
      %p244 = pneg %p174
      %p245 = pneg %p171
      %p246 = scmp.lt.s32.totalorder %s17, 1
      %s247 = scalar_select %p246, %s17, 1
      %s248 = smul.addr %s247, 8
      %s249 = scalar_lea.vmem %s6, %s248
      %p250 = scmp.lt.s32.totalorder %s17, 1
      %s251 = scalar_select %p250, %s17, 1
      %s252 = smul.addr %s251, 8
      %s253 = scalar_lea.vmem %s0, %s252
      %p254 = scmp.lt.s32.totalorder %s17, 1
      %s255 = scalar_select %p254, %s17, 1
      %s256 = scalar_lea.vmem %s5, %s255
      %p257 = scmp.lt.s32.totalorder %s17, 1
      %s258 = scalar_select %p257, %s17, 1
      %s259 = smul.addr %s258, 8
      %s260 = scalar_lea.vmem %s6, %s259
      %v262 = vld [vmem:[%s253] sm:$0xff]
      %v263 = vld [vmem:[%s1] sm:$0x1]
      %v264 = vmul.f32 %v262, %v262
      %vm265 = vcmask 261120
      %v266 = vsel %vm265, %v264, 0.0
      %267 = vadd.xlane.f32.xlu0 %v266
      %v268 = vpop.xlane.xlu0 %267
      %v269 = vrcp.pop 32.0
      %v270 = vmul.f32 32.0, %v269
      %v271 = vsub.f32 1.0, %v270
      %v272 = vmul.f32 %v269, %v271
      %v273 = vadd.f32 %v269, %v272
      %vm274 = vweird.f32 %v269
      %v275 = vsel %vm274, %v269, %v273
      %v276 = vmul.f32 %v268, %v275
      %v277 = vadd.f32 %v276, 1e-06
      %v278 = vrsqrt.pop %v277
      %v279 = vmul.f32 %v278, %v277
      %v280 = vmul.f32 %v279, %v278
      %v281 = vmul.f32 0.5, %v280
      %v282 = vsub.f32 1.5, %v281
      %v283 = vmul.f32 %v278, %v282
      %vm284 = vweird.f32 %v277
      %vm285 = vweird.f32 %v278
      %vm286 = vmor %vm284, %vm285
      %v287 = vsel %vm286, %v278, %v283
      %v288 = vmul.f32 %v262, %v287
      %v290 = vperm.slane %v263, 0
      %v292 = vmul.f32 %v288, %v290
      %v293 = vpack.c.bf16 %v292, %v292
      %v294 = vld [vmem:[%s2] sm:$0xf]
      %v295 = vld [vmem:[%s2 + $0x4] sm:$0xf]
      %v296 = vld [vmem:[%s2 + $0x8] sm:$0xf]
      %v297 = vld [vmem:[%s2 + $0xc] sm:$0xf]
      %v302 = vunpack.c.l.b16 %v294
      %v303 = vunpack.c.l.b16 %v295
      %v304 = vunpack.c.l.b16 %v296
      %v305 = vunpack.c.l.b16 %v297
      %v306 = vpack.c.b16 %v303, %v302
      %v307 = vpack.c.b16 %v305, %v304
      %v311 = vsel %vm265, %v293, 0
      %313 = vmatpush.bf16.msra.mxu0 0
      %314 = vmatpush.bf16.msra.mxu0 0
      %315 = vmatpush.bf16.msra.mxu0 0
      %316 = vmatpush.bf16.msra.mxu0 0
      %317 = vmatpush.bf16.msra.mxu0 0
      %318 = vmatpush.bf16.msra.mxu0 0
      %319 = vmatpush.bf16.msra.mxu0 %v307
      %320 = vmatpush.bf16.msra.mxu0 %v306
      %321 = vmatmul.bf16.gmra.mxu0 %v311
      %v322 = vpop.f32.mrf.mxu0
      %v323 = vadd.f32 0.0, %v322
      %v324 = vpop.f32.mrf.mxu0
      %325 = vdwg.mxu0
      %v326 = vld [vmem:[%s256] sm:$0x1]
      %v327 = vpack.c.bf16 %v323, %v323
      %v328 = vld [vmem:[%s4] sm:$0xff]
      %330 = vrot.lane.b32.xlu0 %v327, 96
      %v331 = vpop.permute.xlu0 %330
      %vm332 = vcmask 64512
      %v334 = vsel %vm332, %v327, 0
      %v337 = vsel %vm332, %v331, 0
      %339 = vmatpush.bf16.xpose.msra.mxu0 0
      %340 = vmatpush.bf16.xpose.msra.mxu0 0
      %341 = vmatpush.bf16.xpose.msra.mxu0 0
      %342 = vmatpush.bf16.xpose.msra.mxu0 0
      %343 = vmatpush.bf16.xpose.msra.mxu0 0
      %344 = vmatpush.bf16.xpose.msra.mxu0 0
      %345 = vmatpush.bf16.xpose.msra.mxu0 0
      %346 = vmatpush.bf16.xpose.msra.mxu0 %v337
      %347 = vmatmul.bf16.gmra.mxu0 %v334
      %v348 = vpop.f32.mrf.mxu0
      %v349 = vadd.f32 %v328, %v348
      %v350 = vpop.f32.mrf.mxu0
      %351 = vdwg.mxu0
      %v353 = vperm.slane %v326, 0
      %v355 = vadd.f32 %v349, %v353
      %v356 = vsel %vm332, %v355, -inf
      %357 = vmax.xlane.f32.xlu0 %v356
      %v358 = vpop.xlane.xlu0 %357
      %v359 = vsub.f32 %v355, %v358
      %v360 = vmul.f32 %v359, 1.442695
      %v361 = vpow.pop %v360
      %v362 = vsel %vm332, %v361, 0.0
      %363 = vadd.xlane.f32.xlu0 %v362
      %v364 = vpop.xlane.xlu0 %363
      %v365 = vrcp.pop %v364
      %v366 = vmul.f32 %v361, %v365
      %v367 = vpack.c.bf16 %v366, %v366
      %368 = vrot.lane.b32.xlu0 %v327, 64
      %v369 = vpop.permute.xlu0 %368
      %v371 = vsel %vm332, %v367, 0
      %vm373 = vcmask 1043456
      %v375 = vsel %vm373, %v369, 0
      %377 = vmatpush.bf16.msra.mxu0 0
      %378 = vmatpush.bf16.msra.mxu0 0
      %379 = vmatpush.bf16.msra.mxu0 0
      %380 = vmatpush.bf16.msra.mxu0 0
      %381 = vmatpush.bf16.msra.mxu0 0
      %382 = vmatpush.bf16.msra.mxu0 0
      %383 = vmatpush.bf16.msra.mxu0 0
      %384 = vmatpush.bf16.msra.mxu0 %v375
      %385 = vmatmul.bf16.gmra.mxu0 %v371
      %v386 = vpop.f32.mrf.mxu0
      %v387 = vadd.f32 0.0, %v386
      %v388 = vpop.f32.mrf.mxu0
      %389 = vdwg.mxu0
      %s390 = scalar_lea.vmem %s4, 8
      %v391 = vld [vmem:[%s390] sm:$0xff]
      %392 = vrot.lane.b32.xlu0 %v327, 120
      %v393 = vpop.permute.xlu0 %392
      %394 = vrot.lane.b32.xlu0 %v327, 88
      %v395 = vpop.permute.xlu0 %394
      %v397 = vsel %vm332, %v393, 0
      %v400 = vsel %vm332, %v395, 0
      %402 = vmatpush.bf16.xpose.msra.mxu0 0
      %403 = vmatpush.bf16.xpose.msra.mxu0 0
      %404 = vmatpush.bf16.xpose.msra.mxu0 0
      %405 = vmatpush.bf16.xpose.msra.mxu0 0
      %406 = vmatpush.bf16.xpose.msra.mxu0 0
      %407 = vmatpush.bf16.xpose.msra.mxu0 0
      %408 = vmatpush.bf16.xpose.msra.mxu0 0
      %409 = vmatpush.bf16.xpose.msra.mxu0 %v400
      %410 = vmatmul.bf16.gmra.mxu0 %v397
      %v411 = vpop.f32.mrf.mxu0
      %v412 = vadd.f32 %v391, %v411
      %v413 = vpop.f32.mrf.mxu0
      %414 = vdwg.mxu0
      %v415 = vadd.f32 %v412, %v353
      %v416 = vsel %vm332, %v415, -inf
      %417 = vmax.xlane.f32.xlu0 %v416
      %v418 = vpop.xlane.xlu0 %417
      %v419 = vsub.f32 %v415, %v418
      %v420 = vmul.f32 %v419, 1.442695
      %v421 = vpow.pop %v420
      %v422 = vsel %vm332, %v421, 0.0
      %423 = vadd.xlane.f32.xlu0 %v422
      %v424 = vpop.xlane.xlu0 %423
      %v425 = vrcp.pop %v424
      %v426 = vmul.f32 %v421, %v425
      %v427 = vpack.c.bf16 %v426, %v426
      %428 = vrot.lane.b32.xlu0 %v327, 56
      %v429 = vpop.permute.xlu0 %428
      %v431 = vsel %vm332, %v427, 0
      %v434 = vsel %vm373, %v429, 0
      %436 = vmatpush.bf16.msra.mxu0 0
      %437 = vmatpush.bf16.msra.mxu0 0
      %438 = vmatpush.bf16.msra.mxu0 0
      %439 = vmatpush.bf16.msra.mxu0 0
      %440 = vmatpush.bf16.msra.mxu0 0
      %441 = vmatpush.bf16.msra.mxu0 0
      %442 = vmatpush.bf16.msra.mxu0 0
      %443 = vmatpush.bf16.msra.mxu0 %v434
      %444 = vmatmul.bf16.gmra.mxu0 %v431
      %v445 = vpop.f32.mrf.mxu0
      %v446 = vadd.f32 0.0, %v445
      %v447 = vpop.f32.mrf.mxu0
      %448 = vdwg.mxu0
      %s449 = scalar_lea.vmem %s4, 16
      %v450 = vld [vmem:[%s449] sm:$0xff]
      %451 = vrot.lane.b32.xlu0 %v327, 112
      %v452 = vpop.permute.xlu0 %451
      %453 = vrot.lane.b32.xlu0 %v327, 80
      %v454 = vpop.permute.xlu0 %453
      %v456 = vsel %vm332, %v452, 0
      %v459 = vsel %vm332, %v454, 0
      %461 = vmatpush.bf16.xpose.msra.mxu0 0
      %462 = vmatpush.bf16.xpose.msra.mxu0 0
      %463 = vmatpush.bf16.xpose.msra.mxu0 0
      %464 = vmatpush.bf16.xpose.msra.mxu0 0
      %465 = vmatpush.bf16.xpose.msra.mxu0 0
      %466 = vmatpush.bf16.xpose.msra.mxu0 0
      %467 = vmatpush.bf16.xpose.msra.mxu0 0
      %468 = vmatpush.bf16.xpose.msra.mxu0 %v459
      %469 = vmatmul.bf16.gmra.mxu0 %v456
      %v470 = vpop.f32.mrf.mxu0
      %v471 = vadd.f32 %v450, %v470
      %v472 = vpop.f32.mrf.mxu0
      %473 = vdwg.mxu0
      %v474 = vadd.f32 %v471, %v353
      %v475 = vsel %vm332, %v474, -inf
      %476 = vmax.xlane.f32.xlu0 %v475
      %v477 = vpop.xlane.xlu0 %476
      %v478 = vsub.f32 %v474, %v477
      %v479 = vmul.f32 %v478, 1.442695
      %v480 = vpow.pop %v479
      %v481 = vsel %vm332, %v480, 0.0
      %482 = vadd.xlane.f32.xlu0 %v481
      %v483 = vpop.xlane.xlu0 %482
      %v484 = vrcp.pop %v483
      %v485 = vmul.f32 %v480, %v484
      %v486 = vpack.c.bf16 %v485, %v485
      %487 = vrot.lane.b32.xlu0 %v327, 48
      %v488 = vpop.permute.xlu0 %487
      %v490 = vsel %vm332, %v486, 0
      %v493 = vsel %vm373, %v488, 0
      %495 = vmatpush.bf16.msra.mxu0 0
      %496 = vmatpush.bf16.msra.mxu0 0
      %497 = vmatpush.bf16.msra.mxu0 0
      %498 = vmatpush.bf16.msra.mxu0 0
      %499 = vmatpush.bf16.msra.mxu0 0
      %500 = vmatpush.bf16.msra.mxu0 0
      %501 = vmatpush.bf16.msra.mxu0 0
      %502 = vmatpush.bf16.msra.mxu0 %v493
      %503 = vmatmul.bf16.gmra.mxu0 %v490
      %v504 = vpop.f32.mrf.mxu0
      %v505 = vadd.f32 0.0, %v504
      %v506 = vpop.f32.mrf.mxu0
      %507 = vdwg.mxu0
      %s508 = scalar_lea.vmem %s4, 24
      %v509 = vld [vmem:[%s508] sm:$0xff]
      %510 = vrot.lane.b32.xlu0 %v327, 104
      %v511 = vpop.permute.xlu0 %510
      %512 = vrot.lane.b32.xlu0 %v327, 72
      %v513 = vpop.permute.xlu0 %512
      %v515 = vsel %vm332, %v511, 0
      %v518 = vsel %vm332, %v513, 0
      %520 = vmatpush.bf16.xpose.msra.mxu0 0
      %521 = vmatpush.bf16.xpose.msra.mxu0 0
      %522 = vmatpush.bf16.xpose.msra.mxu0 0
      %523 = vmatpush.bf16.xpose.msra.mxu0 0
      %524 = vmatpush.bf16.xpose.msra.mxu0 0
      %525 = vmatpush.bf16.xpose.msra.mxu0 0
      %526 = vmatpush.bf16.xpose.msra.mxu0 0
      %527 = vmatpush.bf16.xpose.msra.mxu0 %v518
      %528 = vmatmul.bf16.gmra.mxu0 %v515
      %v529 = vpop.f32.mrf.mxu0
      %v530 = vadd.f32 %v509, %v529
      %v531 = vpop.f32.mrf.mxu0
      %532 = vdwg.mxu0
      %v533 = vadd.f32 %v530, %v353
      %v534 = vsel %vm332, %v533, -inf
      %535 = vmax.xlane.f32.xlu0 %v534
      %v536 = vpop.xlane.xlu0 %535
      %v537 = vsub.f32 %v533, %v536
      %v538 = vmul.f32 %v537, 1.442695
      %v539 = vpow.pop %v538
      %v540 = vsel %vm332, %v539, 0.0
      %541 = vadd.xlane.f32.xlu0 %v540
      %v542 = vpop.xlane.xlu0 %541
      %v543 = vrcp.pop %v542
      %v544 = vmul.f32 %v539, %v543
      %v545 = vpack.c.bf16 %v544, %v544
      %546 = vrot.lane.b32.xlu0 %v327, 40
      %v547 = vpop.permute.xlu0 %546
      %v549 = vsel %vm332, %v545, 0
      %v552 = vsel %vm373, %v547, 0
      %554 = vmatpush.bf16.msra.mxu0 0
      %555 = vmatpush.bf16.msra.mxu0 0
      %556 = vmatpush.bf16.msra.mxu0 0
      %557 = vmatpush.bf16.msra.mxu0 0
      %558 = vmatpush.bf16.msra.mxu0 0
      %559 = vmatpush.bf16.msra.mxu0 0
      %560 = vmatpush.bf16.msra.mxu0 0
      %561 = vmatpush.bf16.msra.mxu0 %v552
      %562 = vmatmul.bf16.gmra.mxu0 %v549
      %v563 = vpop.f32.mrf.mxu0
      %v564 = vadd.f32 0.0, %v563
      %v565 = vpop.f32.mrf.mxu0
      %566 = vdwg.mxu0
      %568 = vrot.lane.b32.xlu0 %v446, 8
      %v569 = vpop.permute.xlu0 %568
      %572 = vrot.lane.b32.xlu0 %v505, 16
      %v573 = vpop.permute.xlu0 %572
      %576 = vrot.lane.b32.xlu0 %v564, 24
      %v577 = vpop.permute.xlu0 %576
      %v579 = vsel %vm332, %v387, %v569
      %vm580 = vcmask 130048
      %v581 = vsel %vm580, %v579, %v573
      %vm582 = vcmask 195584
      %v583 = vsel %vm582, %v581, %v577
      %v584 = vpack.c.bf16 %v583, %v583
      %v585 = vld [vmem:[%s3] sm:$0xf]
      %v586 = vld [vmem:[%s3 + $0x4] sm:$0xf]
      %v587 = vld [vmem:[%s3 + $0x8] sm:$0xf]
      %v588 = vld [vmem:[%s3 + $0xc] sm:$0xf]
      %v593 = vunpack.c.l.b16 %v585
      %v594 = vunpack.c.l.b16 %v586
      %v595 = vunpack.c.l.b16 %v587
      %v596 = vunpack.c.l.b16 %v588
      %v597 = vpack.c.b16 %v594, %v593
      %v598 = vpack.c.b16 %v596, %v595
      %v602 = vsel %vm265, %v584, 0
      %604 = vmatpush.bf16.msra.mxu0 0
      %605 = vmatpush.bf16.msra.mxu0 0
      %606 = vmatpush.bf16.msra.mxu0 0
      %607 = vmatpush.bf16.msra.mxu0 0
      %608 = vmatpush.bf16.msra.mxu0 0
      %609 = vmatpush.bf16.msra.mxu0 0
      %610 = vmatpush.bf16.msra.mxu0 %v598
      %611 = vmatpush.bf16.msra.mxu0 %v597
      %612 = vmatmul.bf16.gmra.mxu0 %v602
      %v613 = vpop.f32.mrf.mxu0
      %v614 = vadd.f32 0.0, %v613
      %v615 = vpop.f32.mrf.mxu0
      %616 = vdwg.mxu0
      %v617 = vadd.f32 %v262, %v614
      %618 = vst.msk [vmem:[%s260] sm:$0xff] %vm265, %v617
      %p619 = scmp.lt.s32.totalorder %s17, 1
      %s620 = scalar_select %p619, %s17, 1
      %s621 = smul.addr %s620, 8
      %s622 = scalar_lea.vmem %s6, %s621
      // Predicated region
      $region45: #{byt5_with_head_forward.5} parent=43 // pred_check
        %p623 = pneg %p171
      $region46: #{byt5_with_head_forward.5} parent=43 // pred_check_branch
        %625 = sbr.rel (%p623) target = $region48
      $region47: #{byt5_with_head_forward.5} parent=43 // pred_region
        _
      $region48: #{byt5_with_head_forward.5} parent=43 // pred_fallthru
        _
    $region44: #{byt5_with_head_forward.5} parent=5 // pred_fallthru
      _
    %p626 = scmp.le.s32.totalorder 2, %s12
    // Predicated region
    $region49: #{byt5_with_head_forward.5} parent=5 // pred_check
      %p627 = pneg %p626
    $region50: #{byt5_with_head_forward.5} parent=5 // pred_check_branch
      %629 = sbr.rel (%p627) target = $region52
    $region51: #{byt5_with_head_forward.5} parent=5 // pred_region
      %s630 = ssub.s32 %s12, 2
      // Predicated region
      $region53: #{byt5_with_head_forward.5} parent=51 // pred_check
        %p631 = pneg %p177
      $region54: #{byt5_with_head_forward.5} parent=51 // pred_check_branch
        %633 = sbr.rel (%p631) target = $region56
      $region55: #{byt5_with_head_forward.5} parent=51 // pred_region
        %p634 = scmp.lt.s32.totalorder %s18, 1
        %s635 = scalar_select %p634, %s18, 1
        %s636 = smul.addr %s635, 8
        %s637 = scalar_lea.vmem %s6, %s636
      $region56: #{byt5_with_head_forward.5} parent=51 // pred_fallthru
        _
    $region52: #{byt5_with_head_forward.5} parent=5 // pred_fallthru
      _
  $region6: #{byt5_with_head_forward.5} parent=0 // loop_footer
    %s16 = sadd.s32 1, %s12
  $region7: #{byt5_with_head_forward.5} parent=0 // loop_footer_branch
    %11 = sbr.rel target = $region3
  $region8: #{byt5_with_head_forward.5} parent=0 // loop_exit
    _

</llo_original>
